<compile_context>
chip_gen: v7x
topology: tpu7x:2x2x1
jax: 0.10.0
libtpu: 0.0.40
codegen_flags: <defaults>
</compile_context>

<pallas_src>
import jax
import jax.numpy as jnp
from jax.experimental import pallas as pl
from jax.experimental.pallas import tpu as pltpu

EPS = 1e-3


def _bn_kernel(x_ref, params_ref, o_ref):
    # x_ref:      (C, HW) or (N, C, HW) input tile (any float dtype).
    # params_ref: (2, C) lane-dense f32; row 0 = gamma, row 1 = beta.
    # o_ref:      same shape / dtype as x_ref.
    x = x_ref[...].astype(jnp.float32)
    ndim = x.ndim
    c_axis = ndim - 2
    red_axes = tuple(a for a in range(ndim) if a != c_axis)
    red_size = 1
    for a in red_axes:
        red_size *= x.shape[a]
    inv_l = 1.0 / float(red_size)

    # One-pass batch statistics (biased variance, PyTorch training-mode fwd):
    # two reductions (XLU) + one x*x multiply per element.
    s = jnp.sum(x, axis=red_axes, keepdims=True)
    ss = jnp.sum(x * x, axis=red_axes, keepdims=True)
    mean = s * inv_l
    var = jnp.maximum(ss * inv_l - mean * mean, 0.0)
    inv_std = jax.lax.rsqrt(var + EPS)                      # EUP slot

    # Params arrive lane-dense; reorient to the per-channel broadcast shape
    # with a tiny transpose (XLU slot, negligible).
    gamma = jnp.transpose(params_ref[0:1, :]).reshape(mean.shape)
    beta = jnp.transpose(params_ref[1:2, :]).reshape(mean.shape)

    scale = inv_std * gamma
    shift = beta - mean * scale
    # Per-element path: one multiply + one add.
    o_ref[...] = (x * scale + shift).astype(o_ref.dtype)


def batchnorm2d_pallas(x_nchw, gamma, beta):
    """x_nchw: (N, C, H, W); gamma, beta: (C,). Returns (N, C, H, W) in x.dtype."""
    n, c, h, w = x_nchw.shape
    hw = h * w

    # Lane-dense param pack: single tiny DMA / VMEM block.
    params = jnp.stack(
        [gamma.astype(jnp.float32), beta.astype(jnp.float32)], axis=0
    )  # (2, C)

    itemsize = jnp.dtype(x_nchw.dtype).itemsize
    cost = pl.CostEstimate(
        flops=5 * n * c * hw + 4 * c,
        transcendentals=c,
        bytes_accessed=2 * n * c * hw * itemsize + 2 * c * 4,
    )
    cparams = pltpu.CompilerParams(dimension_semantics=("arbitrary",))

    if n == 1:
        # Pure reshape (zero-copy): NCHW with N==1 -> (C, HW).
        x2 = x_nchw.reshape(c, hw)
        out = pl.pallas_call(
            _bn_kernel,
            out_shape=jax.ShapeDtypeStruct((c, hw), x_nchw.dtype),
            grid=(1,),
            in_specs=[
                pl.BlockSpec((c, hw), lambda i: (0, 0)),
                pl.BlockSpec((2, c), lambda i: (0, 0)),
            ],
            out_specs=pl.BlockSpec((c, hw), lambda i: (0, 0)),
            compiler_params=cparams,
            cost_estimate=cost,
        )(x2, params)
        return out.reshape(n, c, h, w)

    # General batch: (N, C, HW), reduce over batch + spatial.
    x3 = x_nchw.reshape(n, c, hw)
    out = pl.pallas_call(
        _bn_kernel,
        out_shape=jax.ShapeDtypeStruct((n, c, hw), x_nchw.dtype),
        grid=(1,),
        in_specs=[
            pl.BlockSpec((n, c_hw_n := c, hw), lambda i: (0, 0, 0)),
            pl.BlockSpec((2, c), lambda i: (0, 0)),
        ],
        out_specs=pl.BlockSpec((n, c, hw), lambda i: (0, 0, 0)),
        compiler_params=cparams,
        cost_estimate=cost,
    )(x3, params)
    return out.reshape(n, c, h, w)


def _reference(x_nchw, gamma, beta):
    mean = jnp.mean(x_nchw, axis=(0, 2, 3), keepdims=True)
    var = jnp.mean((x_nchw - mean) ** 2, axis=(0, 2, 3), keepdims=True)
    g = gamma.reshape(1, -1, 1, 1)
    b = beta.reshape(1, -1, 1, 1)
    return (x_nchw - mean) * jax.lax.rsqrt(var + EPS) * g + b


if __name__ == "__main__":
    key = jax.random.PRNGKey(0)
    kx, kg, kb = jax.random.split(key, 3)

    N, C, H, W = 1, 576, 7, 7  # shape implied by the module (x667)
    x = jax.random.normal(kx, (N, C, H, W), dtype=jnp.float32)
    gamma = 1.0 + 0.1 * jax.random.normal(kg, (C,), dtype=jnp.float32)
    beta = 0.1 * jax.random.normal(kb, (C,), dtype=jnp.float32)

    out = batchnorm2d_pallas(x, gamma, beta)
    out = jax.block_until_ready(out)

    ref = _reference(x, gamma, beta)
    assert out.shape == (N, C, H, W)
    assert out.dtype == x.dtype
    assert jnp.allclose(out, ref, atol=1e-4, rtol=1e-4), float(
        jnp.max(jnp.abs(out - ref))
    )

    print("KERNEL_OK")
</pallas_src>

<mosaic_0001>
module attributes {stable_mosaic.version = 11 : i64} {
  func.func @_bn_kernel(%arg0: i32, %arg1: memref<576x49xf32, #tpu.memory_space<vmem>>, %arg2: memref<2x576xf32, #tpu.memory_space<vmem>>, %arg3: memref<576x49xf32, #tpu.memory_space<vmem>>) attributes {dimension_semantics = [#tpu.dimension_semantics<arbitrary>], iteration_bounds = array<i64: 1>, scalar_prefetch = 0 : i64, scratch_operands = 0 : i64, tpu.core_type = #tpu.core_type<tc>, window_params = [{pipeline_mode = #tpu.pipeline_mode<synchronous>, transform_indices = @transform_0, window_bounds = array<i64: 576, 49>}, {pipeline_mode = #tpu.pipeline_mode<synchronous>, transform_indices = @transform_1, window_bounds = array<i64: 2, 576>}, {pipeline_mode = #tpu.pipeline_mode<synchronous>, transform_indices = @transform_2, window_bounds = array<i64: 576, 49>}]} {
    %c0 = arith.constant 0 : index
    %c0_0 = arith.constant 0 : index
    %0 = vector.load %arg1[%c0, %c0_0] : memref<576x49xf32, #tpu.memory_space<vmem>>, vector<576x49xf32>
    %cst = arith.constant dense<0.000000e+00> : vector<576xf32>
    %1 = vector.multi_reduction <add>, %0, %cst [1] : vector<576x49xf32> to vector<576xf32>
    %2 = vector.shape_cast %1 : vector<576xf32> to vector<576x1xf32>
    %3 = arith.mulf %0, %0 : vector<576x49xf32>
    %cst_1 = arith.constant dense<0.000000e+00> : vector<576xf32>
    %4 = vector.multi_reduction <add>, %3, %cst_1 [1] : vector<576x49xf32> to vector<576xf32>
    %5 = vector.shape_cast %4 : vector<576xf32> to vector<576x1xf32>
    %cst_2 = arith.constant 0.0204081628 : f32
    %6 = vector.broadcast %cst_2 : f32 to vector<576x1xf32>
    %7 = arith.mulf %2, %6 : vector<576x1xf32>
    %cst_3 = arith.constant 0.0204081628 : f32
    %8 = vector.broadcast %cst_3 : f32 to vector<576x1xf32>
    %9 = arith.mulf %5, %8 : vector<576x1xf32>
    %10 = arith.mulf %7, %7 : vector<576x1xf32>
    %11 = arith.subf %9, %10 : vector<576x1xf32>
    %cst_4 = arith.constant 0.000000e+00 : f32
    %12 = vector.broadcast %cst_4 : f32 to vector<576x1xf32>
    %13 = arith.maximumf %11, %12 : vector<576x1xf32>
    %cst_5 = arith.constant 1.000000e-03 : f32
    %14 = vector.broadcast %cst_5 : f32 to vector<576x1xf32>
    %15 = arith.addf %13, %14 : vector<576x1xf32>
    %16 = math.rsqrt %15 : vector<576x1xf32>
    %c0_6 = arith.constant 0 : index
    %c0_7 = arith.constant 0 : index
    %17 = vector.load %arg2[%c0_6, %c0_7] : memref<2x576xf32, #tpu.memory_space<vmem>>, vector<1x576xf32>
    %18 = tpu.transpose %17, [1, 0] : vector<1x576xf32> -> vector<576x1xf32>
    %c1 = arith.constant 1 : index
    %c0_8 = arith.constant 0 : index
    %19 = vector.load %arg2[%c1, %c0_8] : memref<2x576xf32, #tpu.memory_space<vmem>>, vector<1x576xf32>
    %20 = tpu.transpose %19, [1, 0] : vector<1x576xf32> -> vector<576x1xf32>
    %21 = arith.mulf %16, %18 : vector<576x1xf32>
    %22 = arith.mulf %7, %21 : vector<576x1xf32>
    %23 = arith.subf %20, %22 : vector<576x1xf32>
    %24 = vector.broadcast %21 : vector<576x1xf32> to vector<576x49xf32>
    %25 = arith.mulf %0, %24 : vector<576x49xf32>
    %26 = vector.broadcast %23 : vector<576x1xf32> to vector<576x49xf32>
    %27 = arith.addf %25, %26 : vector<576x49xf32>
    %c0_9 = arith.constant 0 : index
    %c0_10 = arith.constant 0 : index
    %28 = vector.load %arg3[%c0_9, %c0_10] : memref<576x49xf32, #tpu.memory_space<vmem>>, vector<576x49xf32>
    tpu.vector_store %arg3[%c0_9, %c0_10], %27 {strides = array<i32>} : memref<576x49xf32, #tpu.memory_space<vmem>>, vector<576x49xf32>,
    return
  }
  func.func @transform_0(%arg0: i32) -> (i32, i32) {
    %c0_i32 = arith.constant 0 : i32
    %c0_i32_0 = arith.constant 0 : i32
    %c0_i32_1 = arith.constant 0 : i32
    return %c0_i32, %c0_i32_0 : i32, i32
  }
  func.func @transform_1(%arg0: i32) -> (i32, i32) {
    %c0_i32 = arith.constant 0 : i32
    %c0_i32_0 = arith.constant 0 : i32
    %c0_i32_1 = arith.constant 0 : i32
    return %c0_i32, %c0_i32_0 : i32, i32
  }
  func.func @transform_2(%arg0: i32) -> (i32, i32) {
    %c0_i32 = arith.constant 0 : i32
    %c0_i32_0 = arith.constant 0 : i32
    %c0_i32_1 = arith.constant 0 : i32
    return %c0_i32, %c0_i32_0 : i32, i32
  }
}

</mosaic_0001>

<llo_original>
// kernel: tpu_custom_call.1
$region0: #{tpu_custom_call.1}
  #allocation0 [shape = 'u32[]', space=smem, size = 0x4, offset = 0x4, fixed_abs, tag = 'smem constant byte address 0x4 - core index']
  #allocation1 [shape = 'u32[144,128]{1,0:T(1,128)}', space=vmem, size = 0x12000, scoped, tag = 'internal scratch']
  %s0 = inlined_call_operand.vmem [shape: f32[576,49], index: 0, kind: input, shape index: {}]
  %s1 = inlined_call_operand.vmem [shape: f32[2,576], index: 1, kind: input, shape index: {}]
  %s2 = inlined_call_operand.vmem [shape: f32[576,49], index: 2, kind: output, shape index: {}]
  %s3 = sld [smem:[#allocation0]]
  $region18: #{tpu_custom_call.1} parent=0
    _
  %s5 = ssub.s32 1, %s3
  %s6 = scalar_select 0, %s5, %s3
  // Predicated region
  $region2: #{tpu_custom_call.1} parent=0 // pred_check
    _
  $region3: #{tpu_custom_call.1} parent=0 // pred_check_branch
    %8 = sbr.rel (0) target = $region5
  $region4: #{tpu_custom_call.1} parent=0 // pred_region
    _
  $region5: #{tpu_custom_call.1} parent=0 // pred_fallthru
    _
  // Predicated region
  $region6: #{tpu_custom_call.1} parent=0 // pred_check
    _
  $region7: #{tpu_custom_call.1} parent=0 // pred_check_branch
    %10 = sbr.rel (0) target = $region9
  $region8: #{tpu_custom_call.1} parent=0 // pred_region
    _
  $region9: #{tpu_custom_call.1} parent=0 // pred_fallthru
    _
  %v11 = vld [vmem:[%s0] sm:$0xff]
  %v12 = vld [vmem:[%s0 + $0x8] sm:$0xff]
  %v13 = vld [vmem:[%s0 + $0x10] sm:$0xff]
  %v14 = vld [vmem:[%s0 + $0x18] sm:$0xff]
  %v15 = vld [vmem:[%s0 + $0x20] sm:$0xff]
  %v16 = vld [vmem:[%s0 + $0x28] sm:$0xff]
  %v17 = vld [vmem:[%s0 + $0x30] sm:$0xff]
  %v18 = vld [vmem:[%s0 + $0x38] sm:$0xff]
  %v19 = vld [vmem:[%s0 + $0x40] sm:$0xff]
  %v20 = vld [vmem:[%s0 + $0x48] sm:$0xff]
  %v21 = vld [vmem:[%s0 + $0x50] sm:$0xff]
  %v22 = vld [vmem:[%s0 + $0x58] sm:$0xff]
  %v23 = vld [vmem:[%s0 + $0x60] sm:$0xff]
  %v24 = vld [vmem:[%s0 + $0x68] sm:$0xff]
  %v25 = vld [vmem:[%s0 + $0x70] sm:$0xff]
  %v26 = vld [vmem:[%s0 + $0x78] sm:$0xff]
  %v27 = vld [vmem:[%s0 + $0x80] sm:$0xff]
  %v28 = vld [vmem:[%s0 + $0x88] sm:$0xff]
  %v29 = vld [vmem:[%s0 + $0x90] sm:$0xff]
  %v30 = vld [vmem:[%s0 + $0x98] sm:$0xff]
  %v31 = vld [vmem:[%s0 + $0xa0] sm:$0xff]
  %v32 = vld [vmem:[%s0 + $0xa8] sm:$0xff]
  %v33 = vld [vmem:[%s0 + $0xb0] sm:$0xff]
  %v34 = vld [vmem:[%s0 + $0xb8] sm:$0xff]
  %v35 = vld [vmem:[%s0 + $0xc0] sm:$0xff]
  %v36 = vld [vmem:[%s0 + $0xc8] sm:$0xff]
  %v37 = vld [vmem:[%s0 + $0xd0] sm:$0xff]
  %v38 = vld [vmem:[%s0 + $0xd8] sm:$0xff]
  %v39 = vld [vmem:[%s0 + $0xe0] sm:$0xff]
  %v40 = vld [vmem:[%s0 + $0xe8] sm:$0xff]
  %v41 = vld [vmem:[%s0 + $0xf0] sm:$0xff]
  %v42 = vld [vmem:[%s0 + $0xf8] sm:$0xff]
  %v43 = vld [vmem:[%s0 + $0x100] sm:$0xff]
  %v44 = vld [vmem:[%s0 + $0x108] sm:$0xff]
  %v45 = vld [vmem:[%s0 + $0x110] sm:$0xff]
  %v46 = vld [vmem:[%s0 + $0x118] sm:$0xff]
  %v47 = vld [vmem:[%s0 + $0x120] sm:$0xff]
  %v48 = vld [vmem:[%s0 + $0x128] sm:$0xff]
  %v49 = vld [vmem:[%s0 + $0x130] sm:$0xff]
  %v50 = vld [vmem:[%s0 + $0x138] sm:$0xff]
  %v51 = vld [vmem:[%s0 + $0x140] sm:$0xff]
  %v52 = vld [vmem:[%s0 + $0x148] sm:$0xff]
  %v53 = vld [vmem:[%s0 + $0x150] sm:$0xff]
  %v54 = vld [vmem:[%s0 + $0x158] sm:$0xff]
  %v55 = vld [vmem:[%s0 + $0x160] sm:$0xff]
  %v56 = vld [vmem:[%s0 + $0x168] sm:$0xff]
  %v57 = vld [vmem:[%s0 + $0x170] sm:$0xff]
  %v58 = vld [vmem:[%s0 + $0x178] sm:$0xff]
  %v59 = vld [vmem:[%s0 + $0x180] sm:$0xff]
  %v60 = vld [vmem:[%s0 + $0x188] sm:$0xff]
  %v61 = vld [vmem:[%s0 + $0x190] sm:$0xff]
  %v62 = vld [vmem:[%s0 + $0x198] sm:$0xff]
  %v63 = vld [vmem:[%s0 + $0x1a0] sm:$0xff]
  %v64 = vld [vmem:[%s0 + $0x1a8] sm:$0xff]
  %v65 = vld [vmem:[%s0 + $0x1b0] sm:$0xff]
  %v66 = vld [vmem:[%s0 + $0x1b8] sm:$0xff]
  %v67 = vld [vmem:[%s0 + $0x1c0] sm:$0xff]
  %v68 = vld [vmem:[%s0 + $0x1c8] sm:$0xff]
  %v69 = vld [vmem:[%s0 + $0x1d0] sm:$0xff]
  %v70 = vld [vmem:[%s0 + $0x1d8] sm:$0xff]
  %v71 = vld [vmem:[%s0 + $0x1e0] sm:$0xff]
  %v72 = vld [vmem:[%s0 + $0x1e8] sm:$0xff]
  %v73 = vld [vmem:[%s0 + $0x1f0] sm:$0xff]
  %v74 = vld [vmem:[%s0 + $0x1f8] sm:$0xff]
  %v75 = vld [vmem:[%s0 + $0x200] sm:$0xff]
  %v76 = vld [vmem:[%s0 + $0x208] sm:$0xff]
  %v77 = vld [vmem:[%s0 + $0x210] sm:$0xff]
  %v78 = vld [vmem:[%s0 + $0x218] sm:$0xff]
  %v79 = vld [vmem:[%s0 + $0x220] sm:$0xff]
  %v80 = vld [vmem:[%s0 + $0x228] sm:$0xff]
  %v81 = vld [vmem:[%s0 + $0x230] sm:$0xff]
  %v82 = vld [vmem:[%s0 + $0x238] sm:$0xff]
  %vm83 = vcmask 400384
  %v84 = vsel %vm83, %v11, 0.0
  %85 = vadd.xlane.f32.xlu0 %v84
  %v86 = vpop.xlane.xlu0 %85
  %v87 = vsel %vm83, %v12, 0.0
  %88 = vadd.xlane.f32.xlu0 %v87
  %v89 = vpop.xlane.xlu0 %88
  %v90 = vsel %vm83, %v13, 0.0
  %91 = vadd.xlane.f32.xlu0 %v90
  %v92 = vpop.xlane.xlu0 %91
  %v93 = vsel %vm83, %v14, 0.0
  %94 = vadd.xlane.f32.xlu0 %v93
  %v95 = vpop.xlane.xlu0 %94
  %v96 = vsel %vm83, %v15, 0.0
  %97 = vadd.xlane.f32.xlu0 %v96
  %v98 = vpop.xlane.xlu0 %97
  %v99 = vsel %vm83, %v16, 0.0
  %100 = vadd.xlane.f32.xlu0 %v99
  %v101 = vpop.xlane.xlu0 %100
  %v102 = vsel %vm83, %v17, 0.0
  %103 = vadd.xlane.f32.xlu0 %v102
  %v104 = vpop.xlane.xlu0 %103
  %v105 = vsel %vm83, %v18, 0.0
  %106 = vadd.xlane.f32.xlu0 %v105
  %v107 = vpop.xlane.xlu0 %106
  %v108 = vsel %vm83, %v19, 0.0
  %109 = vadd.xlane.f32.xlu0 %v108
  %v110 = vpop.xlane.xlu0 %109
  %v111 = vsel %vm83, %v20, 0.0
  %112 = vadd.xlane.f32.xlu0 %v111
  %v113 = vpop.xlane.xlu0 %112
  %v114 = vsel %vm83, %v21, 0.0
  %115 = vadd.xlane.f32.xlu0 %v114
  %v116 = vpop.xlane.xlu0 %115
  %v117 = vsel %vm83, %v22, 0.0
  %118 = vadd.xlane.f32.xlu0 %v117
  %v119 = vpop.xlane.xlu0 %118
  %v120 = vsel %vm83, %v23, 0.0
  %121 = vadd.xlane.f32.xlu0 %v120
  %v122 = vpop.xlane.xlu0 %121
  %v123 = vsel %vm83, %v24, 0.0
  %124 = vadd.xlane.f32.xlu0 %v123
  %v125 = vpop.xlane.xlu0 %124
  %v126 = vsel %vm83, %v25, 0.0
  %127 = vadd.xlane.f32.xlu0 %v126
  %v128 = vpop.xlane.xlu0 %127
  %v129 = vsel %vm83, %v26, 0.0
  %130 = vadd.xlane.f32.xlu0 %v129
  %v131 = vpop.xlane.xlu0 %130
  %v132 = vsel %vm83, %v27, 0.0
  %133 = vadd.xlane.f32.xlu0 %v132
  %v134 = vpop.xlane.xlu0 %133
  %v135 = vsel %vm83, %v28, 0.0
  %136 = vadd.xlane.f32.xlu0 %v135
  %v137 = vpop.xlane.xlu0 %136
  %v138 = vsel %vm83, %v29, 0.0
  %139 = vadd.xlane.f32.xlu0 %v138
  %v140 = vpop.xlane.xlu0 %139
  %v141 = vsel %vm83, %v30, 0.0
  %142 = vadd.xlane.f32.xlu0 %v141
  %v143 = vpop.xlane.xlu0 %142
  %v144 = vsel %vm83, %v31, 0.0
  %145 = vadd.xlane.f32.xlu0 %v144
  %v146 = vpop.xlane.xlu0 %145
  %v147 = vsel %vm83, %v32, 0.0
  %148 = vadd.xlane.f32.xlu0 %v147
  %v149 = vpop.xlane.xlu0 %148
  %v150 = vsel %vm83, %v33, 0.0
  %151 = vadd.xlane.f32.xlu0 %v150
  %v152 = vpop.xlane.xlu0 %151
  %v153 = vsel %vm83, %v34, 0.0
  %154 = vadd.xlane.f32.xlu0 %v153
  %v155 = vpop.xlane.xlu0 %154
  %v156 = vsel %vm83, %v35, 0.0
  %157 = vadd.xlane.f32.xlu0 %v156
  %v158 = vpop.xlane.xlu0 %157
  %v159 = vsel %vm83, %v36, 0.0
  %160 = vadd.xlane.f32.xlu0 %v159
  %v161 = vpop.xlane.xlu0 %160
  %v162 = vsel %vm83, %v37, 0.0
  %163 = vadd.xlane.f32.xlu0 %v162
  %v164 = vpop.xlane.xlu0 %163
  %v165 = vsel %vm83, %v38, 0.0
  %166 = vadd.xlane.f32.xlu0 %v165
  %v167 = vpop.xlane.xlu0 %166
  %v168 = vsel %vm83, %v39, 0.0
  %169 = vadd.xlane.f32.xlu0 %v168
  %v170 = vpop.xlane.xlu0 %169
  %v171 = vsel %vm83, %v40, 0.0
  %172 = vadd.xlane.f32.xlu0 %v171
  %v173 = vpop.xlane.xlu0 %172
  %v174 = vsel %vm83, %v41, 0.0
  %175 = vadd.xlane.f32.xlu0 %v174
  %v176 = vpop.xlane.xlu0 %175
  %v177 = vsel %vm83, %v42, 0.0
  %178 = vadd.xlane.f32.xlu0 %v177
  %v179 = vpop.xlane.xlu0 %178
  %v180 = vsel %vm83, %v43, 0.0
  %181 = vadd.xlane.f32.xlu0 %v180
  %v182 = vpop.xlane.xlu0 %181
  %v183 = vsel %vm83, %v44, 0.0
  %184 = vadd.xlane.f32.xlu0 %v183
  %v185 = vpop.xlane.xlu0 %184
  %v186 = vsel %vm83, %v45, 0.0
  %187 = vadd.xlane.f32.xlu0 %v186
  %v188 = vpop.xlane.xlu0 %187
  %v189 = vsel %vm83, %v46, 0.0
  %190 = vadd.xlane.f32.xlu0 %v189
  %v191 = vpop.xlane.xlu0 %190
  %v192 = vsel %vm83, %v47, 0.0
  %193 = vadd.xlane.f32.xlu0 %v192
  %v194 = vpop.xlane.xlu0 %193
  %v195 = vsel %vm83, %v48, 0.0
  %196 = vadd.xlane.f32.xlu0 %v195
  %v197 = vpop.xlane.xlu0 %196
  %v198 = vsel %vm83, %v49, 0.0
  %199 = vadd.xlane.f32.xlu0 %v198
  %v200 = vpop.xlane.xlu0 %199
  %v201 = vsel %vm83, %v50, 0.0
  %202 = vadd.xlane.f32.xlu0 %v201
  %v203 = vpop.xlane.xlu0 %202
  %v204 = vsel %vm83, %v51, 0.0
  %205 = vadd.xlane.f32.xlu0 %v204
  %v206 = vpop.xlane.xlu0 %205
  %v207 = vsel %vm83, %v52, 0.0
  %208 = vadd.xlane.f32.xlu0 %v207
  %v209 = vpop.xlane.xlu0 %208
  %v210 = vsel %vm83, %v53, 0.0
  %211 = vadd.xlane.f32.xlu0 %v210
  %v212 = vpop.xlane.xlu0 %211
  %v213 = vsel %vm83, %v54, 0.0
  %214 = vadd.xlane.f32.xlu0 %v213
  %v215 = vpop.xlane.xlu0 %214
  %v216 = vsel %vm83, %v55, 0.0
  %217 = vadd.xlane.f32.xlu0 %v216
  %v218 = vpop.xlane.xlu0 %217
  %v219 = vsel %vm83, %v56, 0.0
  %220 = vadd.xlane.f32.xlu0 %v219
  %v221 = vpop.xlane.xlu0 %220
  %v222 = vsel %vm83, %v57, 0.0
  %223 = vadd.xlane.f32.xlu0 %v222
  %v224 = vpop.xlane.xlu0 %223
  %v225 = vsel %vm83, %v58, 0.0
  %226 = vadd.xlane.f32.xlu0 %v225
  %v227 = vpop.xlane.xlu0 %226
  %v228 = vsel %vm83, %v59, 0.0
  %229 = vadd.xlane.f32.xlu0 %v228
  %v230 = vpop.xlane.xlu0 %229
  %v231 = vsel %vm83, %v60, 0.0
  %232 = vadd.xlane.f32.xlu0 %v231
  %v233 = vpop.xlane.xlu0 %232
  %v234 = vsel %vm83, %v61, 0.0
  %235 = vadd.xlane.f32.xlu0 %v234
  %v236 = vpop.xlane.xlu0 %235
  %v237 = vsel %vm83, %v62, 0.0
  %238 = vadd.xlane.f32.xlu0 %v237
  %v239 = vpop.xlane.xlu0 %238
  %v240 = vsel %vm83, %v63, 0.0
  %241 = vadd.xlane.f32.xlu0 %v240
  %v242 = vpop.xlane.xlu0 %241
  %v243 = vsel %vm83, %v64, 0.0
  %244 = vadd.xlane.f32.xlu0 %v243
  %v245 = vpop.xlane.xlu0 %244
  %v246 = vsel %vm83, %v65, 0.0
  %247 = vadd.xlane.f32.xlu0 %v246
  %v248 = vpop.xlane.xlu0 %247
  %v249 = vsel %vm83, %v66, 0.0
  %250 = vadd.xlane.f32.xlu0 %v249
  %v251 = vpop.xlane.xlu0 %250
  %v252 = vsel %vm83, %v67, 0.0
  %253 = vadd.xlane.f32.xlu0 %v252
  %v254 = vpop.xlane.xlu0 %253
  %v255 = vsel %vm83, %v68, 0.0
  %256 = vadd.xlane.f32.xlu0 %v255
  %v257 = vpop.xlane.xlu0 %256
  %v258 = vsel %vm83, %v69, 0.0
  %259 = vadd.xlane.f32.xlu0 %v258
  %v260 = vpop.xlane.xlu0 %259
  %v261 = vsel %vm83, %v70, 0.0
  %262 = vadd.xlane.f32.xlu0 %v261
  %v263 = vpop.xlane.xlu0 %262
  %v264 = vsel %vm83, %v71, 0.0
  %265 = vadd.xlane.f32.xlu0 %v264
  %v266 = vpop.xlane.xlu0 %265
  %v267 = vsel %vm83, %v72, 0.0
  %268 = vadd.xlane.f32.xlu0 %v267
  %v269 = vpop.xlane.xlu0 %268
  %v270 = vsel %vm83, %v73, 0.0
  %271 = vadd.xlane.f32.xlu0 %v270
  %v272 = vpop.xlane.xlu0 %271
  %v273 = vsel %vm83, %v74, 0.0
  %274 = vadd.xlane.f32.xlu0 %v273
  %v275 = vpop.xlane.xlu0 %274
  %v276 = vsel %vm83, %v75, 0.0
  %277 = vadd.xlane.f32.xlu0 %v276
  %v278 = vpop.xlane.xlu0 %277
  %v279 = vsel %vm83, %v76, 0.0
  %280 = vadd.xlane.f32.xlu0 %v279
  %v281 = vpop.xlane.xlu0 %280
  %v282 = vsel %vm83, %v77, 0.0
  %283 = vadd.xlane.f32.xlu0 %v282
  %v284 = vpop.xlane.xlu0 %283
  %v285 = vsel %vm83, %v78, 0.0
  %286 = vadd.xlane.f32.xlu0 %v285
  %v287 = vpop.xlane.xlu0 %286
  %v288 = vsel %vm83, %v79, 0.0
  %289 = vadd.xlane.f32.xlu0 %v288
  %v290 = vpop.xlane.xlu0 %289
  %v291 = vsel %vm83, %v80, 0.0
  %292 = vadd.xlane.f32.xlu0 %v291
  %v293 = vpop.xlane.xlu0 %292
  %v294 = vsel %vm83, %v81, 0.0
  %295 = vadd.xlane.f32.xlu0 %v294
  %v296 = vpop.xlane.xlu0 %295
  %v297 = vsel %vm83, %v82, 0.0
  %298 = vadd.xlane.f32.xlu0 %v297
  %v299 = vpop.xlane.xlu0 %298
  %v300 = vmul.f32 %v11, %v11
  %v301 = vmul.f32 %v12, %v12
  %v302 = vmul.f32 %v13, %v13
  %v303 = vmul.f32 %v14, %v14
  %v304 = vmul.f32 %v15, %v15
  %v305 = vmul.f32 %v16, %v16
  %v306 = vmul.f32 %v17, %v17
  %v307 = vmul.f32 %v18, %v18
  %v308 = vmul.f32 %v19, %v19
  %v309 = vmul.f32 %v20, %v20
  %v310 = vmul.f32 %v21, %v21
  %v311 = vmul.f32 %v22, %v22
  %v312 = vmul.f32 %v23, %v23
  %v313 = vmul.f32 %v24, %v24
  %v314 = vmul.f32 %v25, %v25
  %v315 = vmul.f32 %v26, %v26
  %v316 = vmul.f32 %v27, %v27
  %v317 = vmul.f32 %v28, %v28
  %v318 = vmul.f32 %v29, %v29
  %v319 = vmul.f32 %v30, %v30
  %v320 = vmul.f32 %v31, %v31
  %v321 = vmul.f32 %v32, %v32
  %v322 = vmul.f32 %v33, %v33
  %v323 = vmul.f32 %v34, %v34
  %v324 = vmul.f32 %v35, %v35
  %v325 = vmul.f32 %v36, %v36
  %v326 = vmul.f32 %v37, %v37
  %v327 = vmul.f32 %v38, %v38
  %v328 = vmul.f32 %v39, %v39
  %v329 = vmul.f32 %v40, %v40
  %v330 = vmul.f32 %v41, %v41
  %v331 = vmul.f32 %v42, %v42
  %v332 = vmul.f32 %v43, %v43
  %v333 = vmul.f32 %v44, %v44
  %v334 = vmul.f32 %v45, %v45
  %v335 = vmul.f32 %v46, %v46
  %v336 = vmul.f32 %v47, %v47
  %v337 = vmul.f32 %v48, %v48
  %v338 = vmul.f32 %v49, %v49
  %v339 = vmul.f32 %v50, %v50
  %v340 = vmul.f32 %v51, %v51
  %v341 = vmul.f32 %v52, %v52
  %v342 = vmul.f32 %v53, %v53
  %v343 = vmul.f32 %v54, %v54
  %v344 = vmul.f32 %v55, %v55
  %v345 = vmul.f32 %v56, %v56
  %v346 = vmul.f32 %v57, %v57
  %v347 = vmul.f32 %v58, %v58
  %v348 = vmul.f32 %v59, %v59
  %v349 = vmul.f32 %v60, %v60
  %v350 = vmul.f32 %v61, %v61
  %v351 = vmul.f32 %v62, %v62
  %v352 = vmul.f32 %v63, %v63
  %v353 = vmul.f32 %v64, %v64
  %v354 = vmul.f32 %v65, %v65
  %v355 = vmul.f32 %v66, %v66
  %v356 = vmul.f32 %v67, %v67
  %v357 = vmul.f32 %v68, %v68
  %v358 = vmul.f32 %v69, %v69
  %v359 = vmul.f32 %v70, %v70
  %v360 = vmul.f32 %v71, %v71
  %v361 = vmul.f32 %v72, %v72
  %v362 = vmul.f32 %v73, %v73
  %v363 = vmul.f32 %v74, %v74
  %v364 = vmul.f32 %v75, %v75
  %v365 = vmul.f32 %v76, %v76
  %v366 = vmul.f32 %v77, %v77
  %v367 = vmul.f32 %v78, %v78
  %v368 = vmul.f32 %v79, %v79
  %v369 = vmul.f32 %v80, %v80
  %v370 = vmul.f32 %v81, %v81
  %v371 = vmul.f32 %v82, %v82
  %v372 = vsel %vm83, %v300, 0.0
  %373 = vadd.xlane.f32.xlu0 %v372
  %v374 = vpop.xlane.xlu0 %373
  %v375 = vsel %vm83, %v301, 0.0
  %376 = vadd.xlane.f32.xlu0 %v375
  %v377 = vpop.xlane.xlu0 %376
  %v378 = vsel %vm83, %v302, 0.0
  %379 = vadd.xlane.f32.xlu0 %v378
  %v380 = vpop.xlane.xlu0 %379
  %v381 = vsel %vm83, %v303, 0.0
  %382 = vadd.xlane.f32.xlu0 %v381
  %v383 = vpop.xlane.xlu0 %382
  %v384 = vsel %vm83, %v304, 0.0
  %385 = vadd.xlane.f32.xlu0 %v384
  %v386 = vpop.xlane.xlu0 %385
  %v387 = vsel %vm83, %v305, 0.0
  %388 = vadd.xlane.f32.xlu0 %v387
  %v389 = vpop.xlane.xlu0 %388
  %v390 = vsel %vm83, %v306, 0.0
  %391 = vadd.xlane.f32.xlu0 %v390
  %v392 = vpop.xlane.xlu0 %391
  %v393 = vsel %vm83, %v307, 0.0
  %394 = vadd.xlane.f32.xlu0 %v393
  %v395 = vpop.xlane.xlu0 %394
  %v396 = vsel %vm83, %v308, 0.0
  %397 = vadd.xlane.f32.xlu0 %v396
  %v398 = vpop.xlane.xlu0 %397
  %v399 = vsel %vm83, %v309, 0.0
  %400 = vadd.xlane.f32.xlu0 %v399
  %v401 = vpop.xlane.xlu0 %400
  %v402 = vsel %vm83, %v310, 0.0
  %403 = vadd.xlane.f32.xlu0 %v402
  %v404 = vpop.xlane.xlu0 %403
  %v405 = vsel %vm83, %v311, 0.0
  %406 = vadd.xlane.f32.xlu0 %v405
  %v407 = vpop.xlane.xlu0 %406
  %v408 = vsel %vm83, %v312, 0.0
  %409 = vadd.xlane.f32.xlu0 %v408
  %v410 = vpop.xlane.xlu0 %409
  %v411 = vsel %vm83, %v313, 0.0
  %412 = vadd.xlane.f32.xlu0 %v411
  %v413 = vpop.xlane.xlu0 %412
  %v414 = vsel %vm83, %v314, 0.0
  %415 = vadd.xlane.f32.xlu0 %v414
  %v416 = vpop.xlane.xlu0 %415
  %v417 = vsel %vm83, %v315, 0.0
  %418 = vadd.xlane.f32.xlu0 %v417
  %v419 = vpop.xlane.xlu0 %418
  %v420 = vsel %vm83, %v316, 0.0
  %421 = vadd.xlane.f32.xlu0 %v420
  %v422 = vpop.xlane.xlu0 %421
  %v423 = vsel %vm83, %v317, 0.0
  %424 = vadd.xlane.f32.xlu0 %v423
  %v425 = vpop.xlane.xlu0 %424
  %v426 = vsel %vm83, %v318, 0.0
  %427 = vadd.xlane.f32.xlu0 %v426
  %v428 = vpop.xlane.xlu0 %427
  %v429 = vsel %vm83, %v319, 0.0
  %430 = vadd.xlane.f32.xlu0 %v429
  %v431 = vpop.xlane.xlu0 %430
  %v432 = vsel %vm83, %v320, 0.0
  %433 = vadd.xlane.f32.xlu0 %v432
  %v434 = vpop.xlane.xlu0 %433
  %v435 = vsel %vm83, %v321, 0.0
  %436 = vadd.xlane.f32.xlu0 %v435
  %v437 = vpop.xlane.xlu0 %436
  %v438 = vsel %vm83, %v322, 0.0
  %439 = vadd.xlane.f32.xlu0 %v438
  %v440 = vpop.xlane.xlu0 %439
  %v441 = vsel %vm83, %v323, 0.0
  %442 = vadd.xlane.f32.xlu0 %v441
  %v443 = vpop.xlane.xlu0 %442
  %v444 = vsel %vm83, %v324, 0.0
  %445 = vadd.xlane.f32.xlu0 %v444
  %v446 = vpop.xlane.xlu0 %445
  %v447 = vsel %vm83, %v325, 0.0
  %448 = vadd.xlane.f32.xlu0 %v447
  %v449 = vpop.xlane.xlu0 %448
  %v450 = vsel %vm83, %v326, 0.0
  %451 = vadd.xlane.f32.xlu0 %v450
  %v452 = vpop.xlane.xlu0 %451
  %v453 = vsel %vm83, %v327, 0.0
  %454 = vadd.xlane.f32.xlu0 %v453
  %v455 = vpop.xlane.xlu0 %454
  %v456 = vsel %vm83, %v328, 0.0
  %457 = vadd.xlane.f32.xlu0 %v456
  %v458 = vpop.xlane.xlu0 %457
  %v459 = vsel %vm83, %v329, 0.0
  %460 = vadd.xlane.f32.xlu0 %v459
  %v461 = vpop.xlane.xlu0 %460
  %v462 = vsel %vm83, %v330, 0.0
  %463 = vadd.xlane.f32.xlu0 %v462
  %v464 = vpop.xlane.xlu0 %463
  %v465 = vsel %vm83, %v331, 0.0
  %466 = vadd.xlane.f32.xlu0 %v465
  %v467 = vpop.xlane.xlu0 %466
  %v468 = vsel %vm83, %v332, 0.0
  %469 = vadd.xlane.f32.xlu0 %v468
  %v470 = vpop.xlane.xlu0 %469
  %v471 = vsel %vm83, %v333, 0.0
  %472 = vadd.xlane.f32.xlu0 %v471
  %v473 = vpop.xlane.xlu0 %472
  %v474 = vsel %vm83, %v334, 0.0
  %475 = vadd.xlane.f32.xlu0 %v474
  %v476 = vpop.xlane.xlu0 %475
  %v477 = vsel %vm83, %v335, 0.0
  %478 = vadd.xlane.f32.xlu0 %v477
  %v479 = vpop.xlane.xlu0 %478
  %v480 = vsel %vm83, %v336, 0.0
  %481 = vadd.xlane.f32.xlu0 %v480
  %v482 = vpop.xlane.xlu0 %481
  %v483 = vsel %vm83, %v337, 0.0
  %484 = vadd.xlane.f32.xlu0 %v483
  %v485 = vpop.xlane.xlu0 %484
  %v486 = vsel %vm83, %v338, 0.0
  %487 = vadd.xlane.f32.xlu0 %v486
  %v488 = vpop.xlane.xlu0 %487
  %v489 = vsel %vm83, %v339, 0.0
  %490 = vadd.xlane.f32.xlu0 %v489
  %v491 = vpop.xlane.xlu0 %490
  %v492 = vsel %vm83, %v340, 0.0
  %493 = vadd.xlane.f32.xlu0 %v492
  %v494 = vpop.xlane.xlu0 %493
  %v495 = vsel %vm83, %v341, 0.0
  %496 = vadd.xlane.f32.xlu0 %v495
  %v497 = vpop.xlane.xlu0 %496
  %v498 = vsel %vm83, %v342, 0.0
  %499 = vadd.xlane.f32.xlu0 %v498
  %v500 = vpop.xlane.xlu0 %499
  %v501 = vsel %vm83, %v343, 0.0
  %502 = vadd.xlane.f32.xlu0 %v501
  %v503 = vpop.xlane.xlu0 %502
  %v504 = vsel %vm83, %v344, 0.0
  %505 = vadd.xlane.f32.xlu0 %v504
  %v506 = vpop.xlane.xlu0 %505
  %v507 = vsel %vm83, %v345, 0.0
  %508 = vadd.xlane.f32.xlu0 %v507
  %v509 = vpop.xlane.xlu0 %508
  %v510 = vsel %vm83, %v346, 0.0
  %511 = vadd.xlane.f32.xlu0 %v510
  %v512 = vpop.xlane.xlu0 %511
  %v513 = vsel %vm83, %v347, 0.0
  %514 = vadd.xlane.f32.xlu0 %v513
  %v515 = vpop.xlane.xlu0 %514
  %v516 = vsel %vm83, %v348, 0.0
  %517 = vadd.xlane.f32.xlu0 %v516
  %v518 = vpop.xlane.xlu0 %517
  %v519 = vsel %vm83, %v349, 0.0
  %520 = vadd.xlane.f32.xlu0 %v519
  %v521 = vpop.xlane.xlu0 %520
  %v522 = vsel %vm83, %v350, 0.0
  %523 = vadd.xlane.f32.xlu0 %v522
  %v524 = vpop.xlane.xlu0 %523
  %v525 = vsel %vm83, %v351, 0.0
  %526 = vadd.xlane.f32.xlu0 %v525
  %v527 = vpop.xlane.xlu0 %526
  %v528 = vsel %vm83, %v352, 0.0
  %529 = vadd.xlane.f32.xlu0 %v528
  %v530 = vpop.xlane.xlu0 %529
  %v531 = vsel %vm83, %v353, 0.0
  %532 = vadd.xlane.f32.xlu0 %v531
  %v533 = vpop.xlane.xlu0 %532
  %v534 = vsel %vm83, %v354, 0.0
  %535 = vadd.xlane.f32.xlu0 %v534
  %v536 = vpop.xlane.xlu0 %535
  %v537 = vsel %vm83, %v355, 0.0
  %538 = vadd.xlane.f32.xlu0 %v537
  %v539 = vpop.xlane.xlu0 %538
  %v540 = vsel %vm83, %v356, 0.0
  %541 = vadd.xlane.f32.xlu0 %v540
  %v542 = vpop.xlane.xlu0 %541
  %v543 = vsel %vm83, %v357, 0.0
  %544 = vadd.xlane.f32.xlu0 %v543
  %v545 = vpop.xlane.xlu0 %544
  %v546 = vsel %vm83, %v358, 0.0
  %547 = vadd.xlane.f32.xlu0 %v546
  %v548 = vpop.xlane.xlu0 %547
  %v549 = vsel %vm83, %v359, 0.0
  %550 = vadd.xlane.f32.xlu0 %v549
  %v551 = vpop.xlane.xlu0 %550
  %v552 = vsel %vm83, %v360, 0.0
  %553 = vadd.xlane.f32.xlu0 %v552
  %v554 = vpop.xlane.xlu0 %553
  %v555 = vsel %vm83, %v361, 0.0
  %556 = vadd.xlane.f32.xlu0 %v555
  %v557 = vpop.xlane.xlu0 %556
  %v558 = vsel %vm83, %v362, 0.0
  %559 = vadd.xlane.f32.xlu0 %v558
  %v560 = vpop.xlane.xlu0 %559
  %v561 = vsel %vm83, %v363, 0.0
  %562 = vadd.xlane.f32.xlu0 %v561
  %v563 = vpop.xlane.xlu0 %562
  %v564 = vsel %vm83, %v364, 0.0
  %565 = vadd.xlane.f32.xlu0 %v564
  %v566 = vpop.xlane.xlu0 %565
  %v567 = vsel %vm83, %v365, 0.0
  %568 = vadd.xlane.f32.xlu0 %v567
  %v569 = vpop.xlane.xlu0 %568
  %v570 = vsel %vm83, %v366, 0.0
  %571 = vadd.xlane.f32.xlu0 %v570
  %v572 = vpop.xlane.xlu0 %571
  %v573 = vsel %vm83, %v367, 0.0
  %574 = vadd.xlane.f32.xlu0 %v573
  %v575 = vpop.xlane.xlu0 %574
  %v576 = vsel %vm83, %v368, 0.0
  %577 = vadd.xlane.f32.xlu0 %v576
  %v578 = vpop.xlane.xlu0 %577
  %v579 = vsel %vm83, %v369, 0.0
  %580 = vadd.xlane.f32.xlu0 %v579
  %v581 = vpop.xlane.xlu0 %580
  %v582 = vsel %vm83, %v370, 0.0
  %583 = vadd.xlane.f32.xlu0 %v582
  %v584 = vpop.xlane.xlu0 %583
  %v585 = vsel %vm83, %v371, 0.0
  %586 = vadd.xlane.f32.xlu0 %v585
  %v587 = vpop.xlane.xlu0 %586
  %v588 = vmul.f32 %v86, 0.020408163
  %v589 = vmul.f32 %v89, 0.020408163
  %v590 = vmul.f32 %v92, 0.020408163
  %v591 = vmul.f32 %v95, 0.020408163
  %v592 = vmul.f32 %v98, 0.020408163
  %v593 = vmul.f32 %v101, 0.020408163
  %v594 = vmul.f32 %v104, 0.020408163
  %v595 = vmul.f32 %v107, 0.020408163
  %v596 = vmul.f32 %v110, 0.020408163
  %v597 = vmul.f32 %v113, 0.020408163
  %v598 = vmul.f32 %v116, 0.020408163
  %v599 = vmul.f32 %v119, 0.020408163
  %v600 = vmul.f32 %v122, 0.020408163
  %v601 = vmul.f32 %v125, 0.020408163
  %v602 = vmul.f32 %v128, 0.020408163
  %v603 = vmul.f32 %v131, 0.020408163
  %v604 = vmul.f32 %v134, 0.020408163
  %v605 = vmul.f32 %v137, 0.020408163
  %v606 = vmul.f32 %v140, 0.020408163
  %v607 = vmul.f32 %v143, 0.020408163
  %v608 = vmul.f32 %v146, 0.020408163
  %v609 = vmul.f32 %v149, 0.020408163
  %v610 = vmul.f32 %v152, 0.020408163
  %v611 = vmul.f32 %v155, 0.020408163
  %v612 = vmul.f32 %v158, 0.020408163
  %v613 = vmul.f32 %v161, 0.020408163
  %v614 = vmul.f32 %v164, 0.020408163
  %v615 = vmul.f32 %v167, 0.020408163
  %v616 = vmul.f32 %v170, 0.020408163
  %v617 = vmul.f32 %v173, 0.020408163
  %v618 = vmul.f32 %v176, 0.020408163
  %v619 = vmul.f32 %v179, 0.020408163
  %v620 = vmul.f32 %v182, 0.020408163
  %v621 = vmul.f32 %v185, 0.020408163
  %v622 = vmul.f32 %v188, 0.020408163
  %v623 = vmul.f32 %v191, 0.020408163
  %v624 = vmul.f32 %v194, 0.020408163
  %v625 = vmul.f32 %v197, 0.020408163
  %v626 = vmul.f32 %v200, 0.020408163
  %v627 = vmul.f32 %v203, 0.020408163
  %v628 = vmul.f32 %v206, 0.020408163
  %v629 = vmul.f32 %v209, 0.020408163
  %v630 = vmul.f32 %v212, 0.020408163
  %v631 = vmul.f32 %v215, 0.020408163
  %v632 = vmul.f32 %v218, 0.020408163
  %v633 = vmul.f32 %v221, 0.020408163
  %v634 = vmul.f32 %v224, 0.020408163
  %v635 = vmul.f32 %v227, 0.020408163
  %v636 = vmul.f32 %v230, 0.020408163
  %v637 = vmul.f32 %v233, 0.020408163
  %v638 = vmul.f32 %v236, 0.020408163
  %v639 = vmul.f32 %v239, 0.020408163
  %v640 = vmul.f32 %v242, 0.020408163
  %v641 = vmul.f32 %v245, 0.020408163
  %v642 = vmul.f32 %v248, 0.020408163
  %v643 = vmul.f32 %v251, 0.020408163
  %v644 = vmul.f32 %v254, 0.020408163
  %v645 = vmul.f32 %v257, 0.020408163
  %v646 = vmul.f32 %v260, 0.020408163
  %v647 = vmul.f32 %v263, 0.020408163
  %v648 = vmul.f32 %v266, 0.020408163
  %v649 = vmul.f32 %v269, 0.020408163
  %v650 = vmul.f32 %v272, 0.020408163
  %v651 = vmul.f32 %v275, 0.020408163
  %v652 = vmul.f32 %v278, 0.020408163
  %v653 = vmul.f32 %v281, 0.020408163
  %v654 = vmul.f32 %v284, 0.020408163
  %v655 = vmul.f32 %v287, 0.020408163
  %v656 = vmul.f32 %v290, 0.020408163
  %v657 = vmul.f32 %v293, 0.020408163
  %v658 = vmul.f32 %v296, 0.020408163
  %v659 = vmul.f32 %v299, 0.020408163
  %v660 = vmul.f32 %v374, 0.020408163
  %v661 = vmul.f32 %v377, 0.020408163
  %v662 = vmul.f32 %v380, 0.020408163
  %v663 = vmul.f32 %v383, 0.020408163
  %v664 = vmul.f32 %v386, 0.020408163
  %v665 = vmul.f32 %v389, 0.020408163
  %v666 = vmul.f32 %v392, 0.020408163
  %v667 = vmul.f32 %v395, 0.020408163
  %v668 = vmul.f32 %v398, 0.020408163
  %v669 = vmul.f32 %v401, 0.020408163
  %v670 = vmul.f32 %v404, 0.020408163
  %v671 = vmul.f32 %v407, 0.020408163
  %v672 = vmul.f32 %v410, 0.020408163
  %v673 = vmul.f32 %v413, 0.020408163
  %v674 = vmul.f32 %v416, 0.020408163
  %v675 = vmul.f32 %v419, 0.020408163
  %v676 = vmul.f32 %v422, 0.020408163
  %v677 = vmul.f32 %v425, 0.020408163
  %v678 = vmul.f32 %v428, 0.020408163
  %v679 = vmul.f32 %v431, 0.020408163
  %v680 = vmul.f32 %v434, 0.020408163
  %v681 = vmul.f32 %v437, 0.020408163
  %v682 = vmul.f32 %v440, 0.020408163
  %v683 = vmul.f32 %v443, 0.020408163
  %v684 = vmul.f32 %v446, 0.020408163
  %v685 = vmul.f32 %v449, 0.020408163
  %v686 = vmul.f32 %v452, 0.020408163
  %v687 = vmul.f32 %v455, 0.020408163
  %v688 = vmul.f32 %v458, 0.020408163
  %v689 = vmul.f32 %v461, 0.020408163
  %v690 = vmul.f32 %v464, 0.020408163
  %v691 = vmul.f32 %v467, 0.020408163
  %v692 = vmul.f32 %v470, 0.020408163
  %v693 = vmul.f32 %v473, 0.020408163
  %v694 = vmul.f32 %v476, 0.020408163
  %v695 = vmul.f32 %v479, 0.020408163
  %v696 = vmul.f32 %v482, 0.020408163
  %v697 = vmul.f32 %v485, 0.020408163
  %v698 = vmul.f32 %v488, 0.020408163
  %v699 = vmul.f32 %v491, 0.020408163
  %v700 = vmul.f32 %v494, 0.020408163
  %v701 = vmul.f32 %v497, 0.020408163
  %v702 = vmul.f32 %v500, 0.020408163
  %v703 = vmul.f32 %v503, 0.020408163
  %v704 = vmul.f32 %v506, 0.020408163
  %v705 = vmul.f32 %v509, 0.020408163
  %v706 = vmul.f32 %v512, 0.020408163
  %v707 = vmul.f32 %v515, 0.020408163
  %v708 = vmul.f32 %v518, 0.020408163
  %v709 = vmul.f32 %v521, 0.020408163
  %v710 = vmul.f32 %v524, 0.020408163
  %v711 = vmul.f32 %v527, 0.020408163
  %v712 = vmul.f32 %v530, 0.020408163
  %v713 = vmul.f32 %v533, 0.020408163
  %v714 = vmul.f32 %v536, 0.020408163
  %v715 = vmul.f32 %v539, 0.020408163
  %v716 = vmul.f32 %v542, 0.020408163
  %v717 = vmul.f32 %v545, 0.020408163
  %v718 = vmul.f32 %v548, 0.020408163
  %v719 = vmul.f32 %v551, 0.020408163
  %v720 = vmul.f32 %v554, 0.020408163
  %v721 = vmul.f32 %v557, 0.020408163
  %v722 = vmul.f32 %v560, 0.020408163
  %v723 = vmul.f32 %v563, 0.020408163
  %v724 = vmul.f32 %v566, 0.020408163
  %v725 = vmul.f32 %v569, 0.020408163
  %v726 = vmul.f32 %v572, 0.020408163
  %v727 = vmul.f32 %v575, 0.020408163
  %v728 = vmul.f32 %v578, 0.020408163
  %v729 = vmul.f32 %v581, 0.020408163
  %v730 = vmul.f32 %v584, 0.020408163
  %v731 = vmul.f32 %v587, 0.020408163
  %v732 = vmul.f32 %v588, %v588
  %v733 = vmul.f32 %v589, %v589
  %v734 = vmul.f32 %v590, %v590
  %v735 = vmul.f32 %v591, %v591
  %v736 = vmul.f32 %v592, %v592
  %v737 = vmul.f32 %v593, %v593
  %v738 = vmul.f32 %v594, %v594
  %v739 = vmul.f32 %v595, %v595
  %v740 = vmul.f32 %v596, %v596
  %v741 = vmul.f32 %v597, %v597
  %v742 = vmul.f32 %v598, %v598
  %v743 = vmul.f32 %v599, %v599
  %v744 = vmul.f32 %v600, %v600
  %v745 = vmul.f32 %v601, %v601
  %v746 = vmul.f32 %v602, %v602
  %v747 = vmul.f32 %v603, %v603
  %v748 = vmul.f32 %v604, %v604
  %v749 = vmul.f32 %v605, %v605
  %v750 = vmul.f32 %v606, %v606
  %v751 = vmul.f32 %v607, %v607
  %v752 = vmul.f32 %v608, %v608
  %v753 = vmul.f32 %v609, %v609
  %v754 = vmul.f32 %v610, %v610
  %v755 = vmul.f32 %v611, %v611
  %v756 = vmul.f32 %v612, %v612
  %v757 = vmul.f32 %v613, %v613
  %v758 = vmul.f32 %v614, %v614
  %v759 = vmul.f32 %v615, %v615
  %v760 = vmul.f32 %v616, %v616
  %v761 = vmul.f32 %v617, %v617
  %v762 = vmul.f32 %v618, %v618
  %v763 = vmul.f32 %v619, %v619
  %v764 = vmul.f32 %v620, %v620
  %v765 = vmul.f32 %v621, %v621
  %v766 = vmul.f32 %v622, %v622
  %v767 = vmul.f32 %v623, %v623
  %v768 = vmul.f32 %v624, %v624
  %v769 = vmul.f32 %v625, %v625
  %v770 = vmul.f32 %v626, %v626
  %v771 = vmul.f32 %v627, %v627
  %v772 = vmul.f32 %v628, %v628
  %v773 = vmul.f32 %v629, %v629
  %v774 = vmul.f32 %v630, %v630
  %v775 = vmul.f32 %v631, %v631
  %v776 = vmul.f32 %v632, %v632
  %v777 = vmul.f32 %v633, %v633
  %v778 = vmul.f32 %v634, %v634
  %v779 = vmul.f32 %v635, %v635
  %v780 = vmul.f32 %v636, %v636
  %v781 = vmul.f32 %v637, %v637
  %v782 = vmul.f32 %v638, %v638
  %v783 = vmul.f32 %v639, %v639
  %v784 = vmul.f32 %v640, %v640
  %v785 = vmul.f32 %v641, %v641
  %v786 = vmul.f32 %v642, %v642
  %v787 = vmul.f32 %v643, %v643
  %v788 = vmul.f32 %v644, %v644
  %v789 = vmul.f32 %v645, %v645
  %v790 = vmul.f32 %v646, %v646
  %v791 = vmul.f32 %v647, %v647
  %v792 = vmul.f32 %v648, %v648
  %v793 = vmul.f32 %v649, %v649
  %v794 = vmul.f32 %v650, %v650
  %v795 = vmul.f32 %v651, %v651
  %v796 = vmul.f32 %v652, %v652
  %v797 = vmul.f32 %v653, %v653
  %v798 = vmul.f32 %v654, %v654
  %v799 = vmul.f32 %v655, %v655
  %v800 = vmul.f32 %v656, %v656
  %v801 = vmul.f32 %v657, %v657
  %v802 = vmul.f32 %v658, %v658
  %v803 = vmul.f32 %v659, %v659
  %v804 = vsub.f32 %v660, %v732
  %v805 = vsub.f32 %v661, %v733
  %v806 = vsub.f32 %v662, %v734
  %v807 = vsub.f32 %v663, %v735
  %v808 = vsub.f32 %v664, %v736
  %v809 = vsub.f32 %v665, %v737
  %v810 = vsub.f32 %v666, %v738
  %v811 = vsub.f32 %v667, %v739
  %v812 = vsub.f32 %v668, %v740
  %v813 = vsub.f32 %v669, %v741
  %v814 = vsub.f32 %v670, %v742
  %v815 = vsub.f32 %v671, %v743
  %v816 = vsub.f32 %v672, %v744
  %v817 = vsub.f32 %v673, %v745
  %v818 = vsub.f32 %v674, %v746
  %v819 = vsub.f32 %v675, %v747
  %v820 = vsub.f32 %v676, %v748
  %v821 = vsub.f32 %v677, %v749
  %v822 = vsub.f32 %v678, %v750
  %v823 = vsub.f32 %v679, %v751
  %v824 = vsub.f32 %v680, %v752
  %v825 = vsub.f32 %v681, %v753
  %v826 = vsub.f32 %v682, %v754
  %v827 = vsub.f32 %v683, %v755
  %v828 = vsub.f32 %v684, %v756
  %v829 = vsub.f32 %v685, %v757
  %v830 = vsub.f32 %v686, %v758
  %v831 = vsub.f32 %v687, %v759
  %v832 = vsub.f32 %v688, %v760
  %v833 = vsub.f32 %v689, %v761
  %v834 = vsub.f32 %v690, %v762
  %v835 = vsub.f32 %v691, %v763
  %v836 = vsub.f32 %v692, %v764
  %v837 = vsub.f32 %v693, %v765
  %v838 = vsub.f32 %v694, %v766
  %v839 = vsub.f32 %v695, %v767
  %v840 = vsub.f32 %v696, %v768
  %v841 = vsub.f32 %v697, %v769
  %v842 = vsub.f32 %v698, %v770
  %v843 = vsub.f32 %v699, %v771
  %v844 = vsub.f32 %v700, %v772
  %v845 = vsub.f32 %v701, %v773
  %v846 = vsub.f32 %v702, %v774
  %v847 = vsub.f32 %v703, %v775
  %v848 = vsub.f32 %v704, %v776
  %v849 = vsub.f32 %v705, %v777
  %v850 = vsub.f32 %v706, %v778
  %v851 = vsub.f32 %v707, %v779
  %v852 = vsub.f32 %v708, %v780
  %v853 = vsub.f32 %v709, %v781
  %v854 = vsub.f32 %v710, %v782
  %v855 = vsub.f32 %v711, %v783
  %v856 = vsub.f32 %v712, %v784
  %v857 = vsub.f32 %v713, %v785
  %v858 = vsub.f32 %v714, %v786
  %v859 = vsub.f32 %v715, %v787
  %v860 = vsub.f32 %v716, %v788
  %v861 = vsub.f32 %v717, %v789
  %v862 = vsub.f32 %v718, %v790
  %v863 = vsub.f32 %v719, %v791
  %v864 = vsub.f32 %v720, %v792
  %v865 = vsub.f32 %v721, %v793
  %v866 = vsub.f32 %v722, %v794
  %v867 = vsub.f32 %v723, %v795
  %v868 = vsub.f32 %v724, %v796
  %v869 = vsub.f32 %v725, %v797
  %v870 = vsub.f32 %v726, %v798
  %v871 = vsub.f32 %v727, %v799
  %v872 = vsub.f32 %v728, %v800
  %v873 = vsub.f32 %v729, %v801
  %v874 = vsub.f32 %v730, %v802
  %v875 = vsub.f32 %v731, %v803
  %v876 = vmax.f32 %v804, 0.0
  %v877 = vmax.f32 %v805, 0.0
  %v878 = vmax.f32 %v806, 0.0
  %v879 = vmax.f32 %v807, 0.0
  %v880 = vmax.f32 %v808, 0.0
  %v881 = vmax.f32 %v809, 0.0
  %v882 = vmax.f32 %v810, 0.0
  %v883 = vmax.f32 %v811, 0.0
  %v884 = vmax.f32 %v812, 0.0
  %v885 = vmax.f32 %v813, 0.0
  %v886 = vmax.f32 %v814, 0.0
  %v887 = vmax.f32 %v815, 0.0
  %v888 = vmax.f32 %v816, 0.0
  %v889 = vmax.f32 %v817, 0.0
  %v890 = vmax.f32 %v818, 0.0
  %v891 = vmax.f32 %v819, 0.0
  %v892 = vmax.f32 %v820, 0.0
  %v893 = vmax.f32 %v821, 0.0
  %v894 = vmax.f32 %v822, 0.0
  %v895 = vmax.f32 %v823, 0.0
  %v896 = vmax.f32 %v824, 0.0
  %v897 = vmax.f32 %v825, 0.0
  %v898 = vmax.f32 %v826, 0.0
  %v899 = vmax.f32 %v827, 0.0
  %v900 = vmax.f32 %v828, 0.0
  %v901 = vmax.f32 %v829, 0.0
  %v902 = vmax.f32 %v830, 0.0
  %v903 = vmax.f32 %v831, 0.0
  %v904 = vmax.f32 %v832, 0.0
  %v905 = vmax.f32 %v833, 0.0
  %v906 = vmax.f32 %v834, 0.0
  %v907 = vmax.f32 %v835, 0.0
  %v908 = vmax.f32 %v836, 0.0
  %v909 = vmax.f32 %v837, 0.0
  %v910 = vmax.f32 %v838, 0.0
  %v911 = vmax.f32 %v839, 0.0
  %v912 = vmax.f32 %v840, 0.0
  %v913 = vmax.f32 %v841, 0.0
  %v914 = vmax.f32 %v842, 0.0
  %v915 = vmax.f32 %v843, 0.0
  %v916 = vmax.f32 %v844, 0.0
  %v917 = vmax.f32 %v845, 0.0
  %v918 = vmax.f32 %v846, 0.0
  %v919 = vmax.f32 %v847, 0.0
  %v920 = vmax.f32 %v848, 0.0
  %v921 = vmax.f32 %v849, 0.0
  %v922 = vmax.f32 %v850, 0.0
  %v923 = vmax.f32 %v851, 0.0
  %v924 = vmax.f32 %v852, 0.0
  %v925 = vmax.f32 %v853, 0.0
  %v926 = vmax.f32 %v854, 0.0
  %v927 = vmax.f32 %v855, 0.0
  %v928 = vmax.f32 %v856, 0.0
  %v929 = vmax.f32 %v857, 0.0
  %v930 = vmax.f32 %v858, 0.0
  %v931 = vmax.f32 %v859, 0.0
  %v932 = vmax.f32 %v860, 0.0
  %v933 = vmax.f32 %v861, 0.0
  %v934 = vmax.f32 %v862, 0.0
  %v935 = vmax.f32 %v863, 0.0
  %v936 = vmax.f32 %v864, 0.0
  %v937 = vmax.f32 %v865, 0.0
  %v938 = vmax.f32 %v866, 0.0
  %v939 = vmax.f32 %v867, 0.0
  %v940 = vmax.f32 %v868, 0.0
  %v941 = vmax.f32 %v869, 0.0
  %v942 = vmax.f32 %v870, 0.0
  %v943 = vmax.f32 %v871, 0.0
  %v944 = vmax.f32 %v872, 0.0
  %v945 = vmax.f32 %v873, 0.0
  %v946 = vmax.f32 %v874, 0.0
  %v947 = vmax.f32 %v875, 0.0
  %v948 = vadd.f32 %v876, 0.001
  %v949 = vadd.f32 %v877, 0.001
  %v950 = vadd.f32 %v878, 0.001
  %v951 = vadd.f32 %v879, 0.001
  %v952 = vadd.f32 %v880, 0.001
  %v953 = vadd.f32 %v881, 0.001
  %v954 = vadd.f32 %v882, 0.001
  %v955 = vadd.f32 %v883, 0.001
  %v956 = vadd.f32 %v884, 0.001
  %v957 = vadd.f32 %v885, 0.001
  %v958 = vadd.f32 %v886, 0.001
  %v959 = vadd.f32 %v887, 0.001
  %v960 = vadd.f32 %v888, 0.001
  %v961 = vadd.f32 %v889, 0.001
  %v962 = vadd.f32 %v890, 0.001
  %v963 = vadd.f32 %v891, 0.001
  %v964 = vadd.f32 %v892, 0.001
  %v965 = vadd.f32 %v893, 0.001
  %v966 = vadd.f32 %v894, 0.001
  %v967 = vadd.f32 %v895, 0.001
  %v968 = vadd.f32 %v896, 0.001
  %v969 = vadd.f32 %v897, 0.001
  %v970 = vadd.f32 %v898, 0.001
  %v971 = vadd.f32 %v899, 0.001
  %v972 = vadd.f32 %v900, 0.001
  %v973 = vadd.f32 %v901, 0.001
  %v974 = vadd.f32 %v902, 0.001
  %v975 = vadd.f32 %v903, 0.001
  %v976 = vadd.f32 %v904, 0.001
  %v977 = vadd.f32 %v905, 0.001
  %v978 = vadd.f32 %v906, 0.001
  %v979 = vadd.f32 %v907, 0.001
  %v980 = vadd.f32 %v908, 0.001
  %v981 = vadd.f32 %v909, 0.001
  %v982 = vadd.f32 %v910, 0.001
  %v983 = vadd.f32 %v911, 0.001
  %v984 = vadd.f32 %v912, 0.001
  %v985 = vadd.f32 %v913, 0.001
  %v986 = vadd.f32 %v914, 0.001
  %v987 = vadd.f32 %v915, 0.001
  %v988 = vadd.f32 %v916, 0.001
  %v989 = vadd.f32 %v917, 0.001
  %v990 = vadd.f32 %v918, 0.001
  %v991 = vadd.f32 %v919, 0.001
  %v992 = vadd.f32 %v920, 0.001
  %v993 = vadd.f32 %v921, 0.001
  %v994 = vadd.f32 %v922, 0.001
  %v995 = vadd.f32 %v923, 0.001
  %v996 = vadd.f32 %v924, 0.001
  %v997 = vadd.f32 %v925, 0.001
  %v998 = vadd.f32 %v926, 0.001
  %v999 = vadd.f32 %v927, 0.001
  %v1000 = vadd.f32 %v928, 0.001
  %v1001 = vadd.f32 %v929, 0.001
  %v1002 = vadd.f32 %v930, 0.001
  %v1003 = vadd.f32 %v931, 0.001
  %v1004 = vadd.f32 %v932, 0.001
  %v1005 = vadd.f32 %v933, 0.001
  %v1006 = vadd.f32 %v934, 0.001
  %v1007 = vadd.f32 %v935, 0.001
  %v1008 = vadd.f32 %v936, 0.001
  %v1009 = vadd.f32 %v937, 0.001
  %v1010 = vadd.f32 %v938, 0.001
  %v1011 = vadd.f32 %v939, 0.001
  %v1012 = vadd.f32 %v940, 0.001
  %v1013 = vadd.f32 %v941, 0.001
  %v1014 = vadd.f32 %v942, 0.001
  %v1015 = vadd.f32 %v943, 0.001
  %v1016 = vadd.f32 %v944, 0.001
  %v1017 = vadd.f32 %v945, 0.001
  %v1018 = vadd.f32 %v946, 0.001
  %v1019 = vadd.f32 %v947, 0.001
  %v1020 = vrsqrt.pop %v948
  %v1021 = vrsqrt.pop %v949
  %v1022 = vrsqrt.pop %v950
  %v1023 = vrsqrt.pop %v951
  %v1024 = vrsqrt.pop %v952
  %v1025 = vrsqrt.pop %v953
  %v1026 = vrsqrt.pop %v954
  %v1027 = vrsqrt.pop %v955
  %v1028 = vrsqrt.pop %v956
  %v1029 = vrsqrt.pop %v957
  %v1030 = vrsqrt.pop %v958
  %v1031 = vrsqrt.pop %v959
  %v1032 = vrsqrt.pop %v960
  %v1033 = vrsqrt.pop %v961
  %v1034 = vrsqrt.pop %v962
  %v1035 = vrsqrt.pop %v963
  %v1036 = vrsqrt.pop %v964
  %v1037 = vrsqrt.pop %v965
  %v1038 = vrsqrt.pop %v966
  %v1039 = vrsqrt.pop %v967
  %v1040 = vrsqrt.pop %v968
  %v1041 = vrsqrt.pop %v969
  %v1042 = vrsqrt.pop %v970
  %v1043 = vrsqrt.pop %v971
  %v1044 = vrsqrt.pop %v972
  %v1045 = vrsqrt.pop %v973
  %v1046 = vrsqrt.pop %v974
  %v1047 = vrsqrt.pop %v975
  %v1048 = vrsqrt.pop %v976
  %v1049 = vrsqrt.pop %v977
  %v1050 = vrsqrt.pop %v978
  %v1051 = vrsqrt.pop %v979
  %v1052 = vrsqrt.pop %v980
  %v1053 = vrsqrt.pop %v981
  %v1054 = vrsqrt.pop %v982
  %v1055 = vrsqrt.pop %v983
  %v1056 = vrsqrt.pop %v984
  %v1057 = vrsqrt.pop %v985
  %v1058 = vrsqrt.pop %v986
  %v1059 = vrsqrt.pop %v987
  %v1060 = vrsqrt.pop %v988
  %v1061 = vrsqrt.pop %v989
  %v1062 = vrsqrt.pop %v990
  %v1063 = vrsqrt.pop %v991
  %v1064 = vrsqrt.pop %v992
  %v1065 = vrsqrt.pop %v993
  %v1066 = vrsqrt.pop %v994
  %v1067 = vrsqrt.pop %v995
  %v1068 = vrsqrt.pop %v996
  %v1069 = vrsqrt.pop %v997
  %v1070 = vrsqrt.pop %v998
  %v1071 = vrsqrt.pop %v999
  %v1072 = vrsqrt.pop %v1000
  %v1073 = vrsqrt.pop %v1001
  %v1074 = vrsqrt.pop %v1002
  %v1075 = vrsqrt.pop %v1003
  %v1076 = vrsqrt.pop %v1004
  %v1077 = vrsqrt.pop %v1005
  %v1078 = vrsqrt.pop %v1006
  %v1079 = vrsqrt.pop %v1007
  %v1080 = vrsqrt.pop %v1008
  %v1081 = vrsqrt.pop %v1009
  %v1082 = vrsqrt.pop %v1010
  %v1083 = vrsqrt.pop %v1011
  %v1084 = vrsqrt.pop %v1012
  %v1085 = vrsqrt.pop %v1013
  %v1086 = vrsqrt.pop %v1014
  %v1087 = vrsqrt.pop %v1015
  %v1088 = vrsqrt.pop %v1016
  %v1089 = vrsqrt.pop %v1017
  %v1090 = vrsqrt.pop %v1018
  %v1091 = vrsqrt.pop %v1019
  %v1092 = vld [vmem:[%s1] ss:$2 sm:$0x1f]
  %v1094 = vlaneseq
  %v1095 = vshrl.u32 %v1094, 7
  %v1096 = vsub.s32 0, %v1095
  %v1097 = vrot.slane %v1092, %v1096
  %v1098 = vlaneseq
  %v1099 = vshrl.u32 %v1098, 7
  %v1100 = vsub.s32 1, %v1099
  %v1101 = vrot.slane %v1092, %v1100
  %v1102 = vlaneseq
  %v1103 = vshrl.u32 %v1102, 7
  %v1104 = vsub.s32 2, %v1103
  %v1105 = vrot.slane %v1092, %v1104
  %v1106 = vlaneseq
  %v1107 = vshrl.u32 %v1106, 7
  %v1108 = vsub.s32 3, %v1107
  %v1109 = vrot.slane %v1092, %v1108
  %v1110 = vlaneseq
  %v1111 = vshrl.u32 %v1110, 7
  %v1112 = vsub.s32 4, %v1111
  %v1113 = vrot.slane %v1092, %v1112
  %1119 = vxpose.xlu0.b32.start [1/16] %v1097, 128
  %1120 = vxpose.xlu0.b32.cont [2/16] 0.0, 128
  %1121 = vxpose.xlu0.b32.cont [3/16] 0.0, 128
  %1122 = vxpose.xlu0.b32.cont [4/16] 0.0, 128
  %1123 = vxpose.xlu0.b32.cont [5/16] 0.0, 128
  %1124 = vxpose.xlu0.b32.cont [6/16] 0.0, 128
  %1125 = vxpose.xlu0.b32.cont [7/16] 0.0, 128
  %1126 = vxpose.xlu0.b32.cont [8/16] 0.0, 128
  %1127 = vxpose.xlu0.b32.cont [9/16] 0.0, 128
  %1128 = vxpose.xlu0.b32.cont [10/16] 0.0, 128
  %1129 = vxpose.xlu0.b32.cont [11/16] 0.0, 128
  %1130 = vxpose.xlu0.b32.cont [12/16] 0.0, 128
  %1131 = vxpose.xlu0.b32.cont [13/16] 0.0, 128
  %1132 = vxpose.xlu0.b32.cont [14/16] 0.0, 128
  %1133 = vxpose.xlu0.b32.cont [15/16] 0.0, 128
  %1134 = vxpose.xlu0.b32.end [16/16] 0.0, 128
  %v1135 = vpop.trf.xlu0
  %v1136 = vpop.trf.xlu0
  %v1137 = vpop.trf.xlu0
  %v1138 = vpop.trf.xlu0
  %v1139 = vpop.trf.xlu0
  %v1140 = vpop.trf.xlu0
  %v1141 = vpop.trf.xlu0
  %v1142 = vpop.trf.xlu0
  %v1143 = vpop.trf.xlu0
  %v1144 = vpop.trf.xlu0
  %v1145 = vpop.trf.xlu0
  %v1146 = vpop.trf.xlu0
  %v1147 = vpop.trf.xlu0
  %v1148 = vpop.trf.xlu0
  %v1149 = vpop.trf.xlu0
  %v1150 = vpop.trf.xlu0
  %1151 = vxpose.xlu0.b32.start [1/16] %v1101, 128
  %1152 = vxpose.xlu0.b32.cont [2/16] 0.0, 128
  %1153 = vxpose.xlu0.b32.cont [3/16] 0.0, 128
  %1154 = vxpose.xlu0.b32.cont [4/16] 0.0, 128
  %1155 = vxpose.xlu0.b32.cont [5/16] 0.0, 128
  %1156 = vxpose.xlu0.b32.cont [6/16] 0.0, 128
  %1157 = vxpose.xlu0.b32.cont [7/16] 0.0, 128
  %1158 = vxpose.xlu0.b32.cont [8/16] 0.0, 128
  %1159 = vxpose.xlu0.b32.cont [9/16] 0.0, 128
  %1160 = vxpose.xlu0.b32.cont [10/16] 0.0, 128
  %1161 = vxpose.xlu0.b32.cont [11/16] 0.0, 128
  %1162 = vxpose.xlu0.b32.cont [12/16] 0.0, 128
  %1163 = vxpose.xlu0.b32.cont [13/16] 0.0, 128
  %1164 = vxpose.xlu0.b32.cont [14/16] 0.0, 128
  %1165 = vxpose.xlu0.b32.cont [15/16] 0.0, 128
  %1166 = vxpose.xlu0.b32.end [16/16] 0.0, 128
  %v1167 = vpop.trf.xlu0
  %v1168 = vpop.trf.xlu0
  %v1169 = vpop.trf.xlu0
  %v1170 = vpop.trf.xlu0
  %v1171 = vpop.trf.xlu0
  %v1172 = vpop.trf.xlu0
  %v1173 = vpop.trf.xlu0
  %v1174 = vpop.trf.xlu0
  %v1175 = vpop.trf.xlu0
  %v1176 = vpop.trf.xlu0
  %v1177 = vpop.trf.xlu0
  %v1178 = vpop.trf.xlu0
  %v1179 = vpop.trf.xlu0
  %v1180 = vpop.trf.xlu0
  %v1181 = vpop.trf.xlu0
  %v1182 = vpop.trf.xlu0
  %1183 = vxpose.xlu0.b32.start [1/16] %v1105, 128
  %1184 = vxpose.xlu0.b32.cont [2/16] 0.0, 128
  %1185 = vxpose.xlu0.b32.cont [3/16] 0.0, 128
  %1186 = vxpose.xlu0.b32.cont [4/16] 0.0, 128
  %1187 = vxpose.xlu0.b32.cont [5/16] 0.0, 128
  %1188 = vxpose.xlu0.b32.cont [6/16] 0.0, 128
  %1189 = vxpose.xlu0.b32.cont [7/16] 0.0, 128
  %1190 = vxpose.xlu0.b32.cont [8/16] 0.0, 128
  %1191 = vxpose.xlu0.b32.cont [9/16] 0.0, 128
  %1192 = vxpose.xlu0.b32.cont [10/16] 0.0, 128
  %1193 = vxpose.xlu0.b32.cont [11/16] 0.0, 128
  %1194 = vxpose.xlu0.b32.cont [12/16] 0.0, 128
  %1195 = vxpose.xlu0.b32.cont [13/16] 0.0, 128
  %1196 = vxpose.xlu0.b32.cont [14/16] 0.0, 128
  %1197 = vxpose.xlu0.b32.cont [15/16] 0.0, 128
  %1198 = vxpose.xlu0.b32.end [16/16] 0.0, 128
  %v1199 = vpop.trf.xlu0
  %v1200 = vpop.trf.xlu0
  %v1201 = vpop.trf.xlu0
  %v1202 = vpop.trf.xlu0
  %v1203 = vpop.trf.xlu0
  %v1204 = vpop.trf.xlu0
  %v1205 = vpop.trf.xlu0
  %v1206 = vpop.trf.xlu0
  %v1207 = vpop.trf.xlu0
  %v1208 = vpop.trf.xlu0
  %v1209 = vpop.trf.xlu0
  %v1210 = vpop.trf.xlu0
  %v1211 = vpop.trf.xlu0
  %v1212 = vpop.trf.xlu0
  %v1213 = vpop.trf.xlu0
  %v1214 = vpop.trf.xlu0
  %1215 = vxpose.xlu0.b32.start [1/16] %v1109, 128
  %1216 = vxpose.xlu0.b32.cont [2/16] 0.0, 128
  %1217 = vxpose.xlu0.b32.cont [3/16] 0.0, 128
  %1218 = vxpose.xlu0.b32.cont [4/16] 0.0, 128
  %1219 = vxpose.xlu0.b32.cont [5/16] 0.0, 128
  %1220 = vxpose.xlu0.b32.cont [6/16] 0.0, 128
  %1221 = vxpose.xlu0.b32.cont [7/16] 0.0, 128
  %1222 = vxpose.xlu0.b32.cont [8/16] 0.0, 128
  %1223 = vxpose.xlu0.b32.cont [9/16] 0.0, 128
  %1224 = vxpose.xlu0.b32.cont [10/16] 0.0, 128
  %1225 = vxpose.xlu0.b32.cont [11/16] 0.0, 128
  %1226 = vxpose.xlu0.b32.cont [12/16] 0.0, 128
  %1227 = vxpose.xlu0.b32.cont [13/16] 0.0, 128
  %1228 = vxpose.xlu0.b32.cont [14/16] 0.0, 128
  %1229 = vxpose.xlu0.b32.cont [15/16] 0.0, 128
  %1230 = vxpose.xlu0.b32.end [16/16] 0.0, 128
  %v1231 = vpop.trf.xlu0
  %v1232 = vpop.trf.xlu0
  %v1233 = vpop.trf.xlu0
  %v1234 = vpop.trf.xlu0
  %v1235 = vpop.trf.xlu0
  %v1236 = vpop.trf.xlu0
  %v1237 = vpop.trf.xlu0
  %v1238 = vpop.trf.xlu0
  %v1239 = vpop.trf.xlu0
  %v1240 = vpop.trf.xlu0
  %v1241 = vpop.trf.xlu0
  %v1242 = vpop.trf.xlu0
  %v1243 = vpop.trf.xlu0
  %v1244 = vpop.trf.xlu0
  %v1245 = vpop.trf.xlu0
  %v1246 = vpop.trf.xlu0
  %1247 = vxpose.xlu0.b32.start [1/16] %v1113, 128
  %1248 = vxpose.xlu0.b32.cont [2/16] 0.0, 128
  %1249 = vxpose.xlu0.b32.cont [3/16] 0.0, 128
  %1250 = vxpose.xlu0.b32.cont [4/16] 0.0, 128
  %1251 = vxpose.xlu0.b32.cont [5/16] 0.0, 128
  %1252 = vxpose.xlu0.b32.cont [6/16] 0.0, 128
  %1253 = vxpose.xlu0.b32.cont [7/16] 0.0, 128
  %1254 = vxpose.xlu0.b32.cont [8/16] 0.0, 128
  %1255 = vxpose.xlu0.b32.cont [9/16] 0.0, 128
  %1256 = vxpose.xlu0.b32.cont [10/16] 0.0, 128
  %1257 = vxpose.xlu0.b32.cont [11/16] 0.0, 128
  %1258 = vxpose.xlu0.b32.cont [12/16] 0.0, 128
  %1259 = vxpose.xlu0.b32.cont [13/16] 0.0, 128
  %1260 = vxpose.xlu0.b32.cont [14/16] 0.0, 128
  %1261 = vxpose.xlu0.b32.cont [15/16] 0.0, 128
  %1262 = vxpose.xlu0.b32.end [16/16] 0.0, 128
  %v1263 = vpop.trf.xlu0
  %v1264 = vpop.trf.xlu0
  %v1265 = vpop.trf.xlu0
  %v1266 = vpop.trf.xlu0
  %v1267 = vpop.trf.xlu0
  %v1268 = vpop.trf.xlu0
  %v1269 = vpop.trf.xlu0
  %v1270 = vpop.trf.xlu0
  %v1271 = vpop.trf.xlu0
  %v1272 = vpop.trf.xlu0
  %v1273 = vpop.trf.xlu0
  %v1274 = vpop.trf.xlu0
  %v1275 = vpop.trf.xlu0
  %v1276 = vpop.trf.xlu0
  %v1277 = vpop.trf.xlu0
  %v1278 = vpop.trf.xlu0
  %s1279 = scalar_lea.vmem %s1, 1
  %v1280 = vld [vmem:[%s1279] ss:$2 sm:$0x1f]
  %v1282 = vlaneseq
  %v1283 = vshrl.u32 %v1282, 7
  %v1284 = vsub.s32 0, %v1283
  %v1285 = vrot.slane %v1280, %v1284
  %v1286 = vlaneseq
  %v1287 = vshrl.u32 %v1286, 7
  %v1288 = vsub.s32 1, %v1287
  %v1289 = vrot.slane %v1280, %v1288
  %v1290 = vlaneseq
  %v1291 = vshrl.u32 %v1290, 7
  %v1292 = vsub.s32 2, %v1291
  %v1293 = vrot.slane %v1280, %v1292
  %v1294 = vlaneseq
  %v1295 = vshrl.u32 %v1294, 7
  %v1296 = vsub.s32 3, %v1295
  %v1297 = vrot.slane %v1280, %v1296
  %v1298 = vlaneseq
  %v1299 = vshrl.u32 %v1298, 7
  %v1300 = vsub.s32 4, %v1299
  %v1301 = vrot.slane %v1280, %v1300
  %1307 = vxpose.xlu0.b32.start [1/16] %v1285, 128
  %1308 = vxpose.xlu0.b32.cont [2/16] 0.0, 128
  %1309 = vxpose.xlu0.b32.cont [3/16] 0.0, 128
  %1310 = vxpose.xlu0.b32.cont [4/16] 0.0, 128
  %1311 = vxpose.xlu0.b32.cont [5/16] 0.0, 128
  %1312 = vxpose.xlu0.b32.cont [6/16] 0.0, 128
  %1313 = vxpose.xlu0.b32.cont [7/16] 0.0, 128
  %1314 = vxpose.xlu0.b32.cont [8/16] 0.0, 128
  %1315 = vxpose.xlu0.b32.cont [9/16] 0.0, 128
  %1316 = vxpose.xlu0.b32.cont [10/16] 0.0, 128
  %1317 = vxpose.xlu0.b32.cont [11/16] 0.0, 128
  %1318 = vxpose.xlu0.b32.cont [12/16] 0.0, 128
  %1319 = vxpose.xlu0.b32.cont [13/16] 0.0, 128
  %1320 = vxpose.xlu0.b32.cont [14/16] 0.0, 128
  %1321 = vxpose.xlu0.b32.cont [15/16] 0.0, 128
  %1322 = vxpose.xlu0.b32.end [16/16] 0.0, 128
  %v1323 = vpop.trf.xlu0
  %v1324 = vpop.trf.xlu0
  %v1325 = vpop.trf.xlu0
  %v1326 = vpop.trf.xlu0
  %v1327 = vpop.trf.xlu0
  %v1328 = vpop.trf.xlu0
  %v1329 = vpop.trf.xlu0
  %v1330 = vpop.trf.xlu0
  %v1331 = vpop.trf.xlu0
  %v1332 = vpop.trf.xlu0
  %v1333 = vpop.trf.xlu0
  %v1334 = vpop.trf.xlu0
  %v1335 = vpop.trf.xlu0
  %v1336 = vpop.trf.xlu0
  %v1337 = vpop.trf.xlu0
  %v1338 = vpop.trf.xlu0
  %1339 = vxpose.xlu0.b32.start [1/16] %v1289, 128
  %1340 = vxpose.xlu0.b32.cont [2/16] 0.0, 128
  %1341 = vxpose.xlu0.b32.cont [3/16] 0.0, 128
  %1342 = vxpose.xlu0.b32.cont [4/16] 0.0, 128
  %1343 = vxpose.xlu0.b32.cont [5/16] 0.0, 128
  %1344 = vxpose.xlu0.b32.cont [6/16] 0.0, 128
  %1345 = vxpose.xlu0.b32.cont [7/16] 0.0, 128
  %1346 = vxpose.xlu0.b32.cont [8/16] 0.0, 128
  %1347 = vxpose.xlu0.b32.cont [9/16] 0.0, 128
  %1348 = vxpose.xlu0.b32.cont [10/16] 0.0, 128
  %1349 = vxpose.xlu0.b32.cont [11/16] 0.0, 128
  %1350 = vxpose.xlu0.b32.cont [12/16] 0.0, 128
  %1351 = vxpose.xlu0.b32.cont [13/16] 0.0, 128
  %1352 = vxpose.xlu0.b32.cont [14/16] 0.0, 128
  %1353 = vxpose.xlu0.b32.cont [15/16] 0.0, 128
  %1354 = vxpose.xlu0.b32.end [16/16] 0.0, 128
  %v1355 = vpop.trf.xlu0
  %v1356 = vpop.trf.xlu0
  %v1357 = vpop.trf.xlu0
  %v1358 = vpop.trf.xlu0
  %v1359 = vpop.trf.xlu0
  %v1360 = vpop.trf.xlu0
  %v1361 = vpop.trf.xlu0
  %v1362 = vpop.trf.xlu0
  %v1363 = vpop.trf.xlu0
  %v1364 = vpop.trf.xlu0
  %v1365 = vpop.trf.xlu0
  %v1366 = vpop.trf.xlu0
  %v1367 = vpop.trf.xlu0
  %v1368 = vpop.trf.xlu0
  %v1369 = vpop.trf.xlu0
  %v1370 = vpop.trf.xlu0
  %1371 = vxpose.xlu0.b32.start [1/16] %v1293, 128
  %1372 = vxpose.xlu0.b32.cont [2/16] 0.0, 128
  %1373 = vxpose.xlu0.b32.cont [3/16] 0.0, 128
  %1374 = vxpose.xlu0.b32.cont [4/16] 0.0, 128
  %1375 = vxpose.xlu0.b32.cont [5/16] 0.0, 128
  %1376 = vxpose.xlu0.b32.cont [6/16] 0.0, 128
  %1377 = vxpose.xlu0.b32.cont [7/16] 0.0, 128
  %1378 = vxpose.xlu0.b32.cont [8/16] 0.0, 128
  %1379 = vxpose.xlu0.b32.cont [9/16] 0.0, 128
  %1380 = vxpose.xlu0.b32.cont [10/16] 0.0, 128
  %1381 = vxpose.xlu0.b32.cont [11/16] 0.0, 128
  %1382 = vxpose.xlu0.b32.cont [12/16] 0.0, 128
  %1383 = vxpose.xlu0.b32.cont [13/16] 0.0, 128
  %1384 = vxpose.xlu0.b32.cont [14/16] 0.0, 128
  %1385 = vxpose.xlu0.b32.cont [15/16] 0.0, 128
  %1386 = vxpose.xlu0.b32.end [16/16] 0.0, 128
  %v1387 = vpop.trf.xlu0
  %v1388 = vpop.trf.xlu0
  %v1389 = vpop.trf.xlu0
  %v1390 = vpop.trf.xlu0
  %v1391 = vpop.trf.xlu0
  %v1392 = vpop.trf.xlu0
  %v1393 = vpop.trf.xlu0
  %v1394 = vpop.trf.xlu0
  %v1395 = vpop.trf.xlu0
  %v1396 = vpop.trf.xlu0
  %v1397 = vpop.trf.xlu0
  %v1398 = vpop.trf.xlu0
  %v1399 = vpop.trf.xlu0
  %v1400 = vpop.trf.xlu0
  %v1401 = vpop.trf.xlu0
  %v1402 = vpop.trf.xlu0
  %1403 = vxpose.xlu0.b32.start [1/16] %v1297, 128
  %1404 = vxpose.xlu0.b32.cont [2/16] 0.0, 128
  %1405 = vxpose.xlu0.b32.cont [3/16] 0.0, 128
  %1406 = vxpose.xlu0.b32.cont [4/16] 0.0, 128
  %1407 = vxpose.xlu0.b32.cont [5/16] 0.0, 128
  %1408 = vxpose.xlu0.b32.cont [6/16] 0.0, 128
  %1409 = vxpose.xlu0.b32.cont [7/16] 0.0, 128
  %1410 = vxpose.xlu0.b32.cont [8/16] 0.0, 128
  %1411 = vxpose.xlu0.b32.cont [9/16] 0.0, 128
  %1412 = vxpose.xlu0.b32.cont [10/16] 0.0, 128
  %1413 = vxpose.xlu0.b32.cont [11/16] 0.0, 128
  %1414 = vxpose.xlu0.b32.cont [12/16] 0.0, 128
  %1415 = vxpose.xlu0.b32.cont [13/16] 0.0, 128
  %1416 = vxpose.xlu0.b32.cont [14/16] 0.0, 128
  %1417 = vxpose.xlu0.b32.cont [15/16] 0.0, 128
  %1418 = vxpose.xlu0.b32.end [16/16] 0.0, 128
  %v1419 = vpop.trf.xlu0
  %v1420 = vpop.trf.xlu0
  %v1421 = vpop.trf.xlu0
  %v1422 = vpop.trf.xlu0
  %v1423 = vpop.trf.xlu0
  %v1424 = vpop.trf.xlu0
  %v1425 = vpop.trf.xlu0
  %v1426 = vpop.trf.xlu0
  %v1427 = vpop.trf.xlu0
  %v1428 = vpop.trf.xlu0
  %v1429 = vpop.trf.xlu0
  %v1430 = vpop.trf.xlu0
  %v1431 = vpop.trf.xlu0
  %v1432 = vpop.trf.xlu0
  %v1433 = vpop.trf.xlu0
  %v1434 = vpop.trf.xlu0
  %1435 = vxpose.xlu0.b32.start [1/16] %v1301, 128
  %1436 = vxpose.xlu0.b32.cont [2/16] 0.0, 128
  %1437 = vxpose.xlu0.b32.cont [3/16] 0.0, 128
  %1438 = vxpose.xlu0.b32.cont [4/16] 0.0, 128
  %1439 = vxpose.xlu0.b32.cont [5/16] 0.0, 128
  %1440 = vxpose.xlu0.b32.cont [6/16] 0.0, 128
  %1441 = vxpose.xlu0.b32.cont [7/16] 0.0, 128
  %1442 = vxpose.xlu0.b32.cont [8/16] 0.0, 128
  %1443 = vxpose.xlu0.b32.cont [9/16] 0.0, 128
  %1444 = vxpose.xlu0.b32.cont [10/16] 0.0, 128
  %1445 = vxpose.xlu0.b32.cont [11/16] 0.0, 128
  %1446 = vxpose.xlu0.b32.cont [12/16] 0.0, 128
  %1447 = vxpose.xlu0.b32.cont [13/16] 0.0, 128
  %1448 = vxpose.xlu0.b32.cont [14/16] 0.0, 128
  %1449 = vxpose.xlu0.b32.cont [15/16] 0.0, 128
  %1450 = vxpose.xlu0.b32.end [16/16] 0.0, 128
  %v1451 = vpop.trf.xlu0
  %v1452 = vpop.trf.xlu0
  %v1453 = vpop.trf.xlu0
  %v1454 = vpop.trf.xlu0
  %v1455 = vpop.trf.xlu0
  %v1456 = vpop.trf.xlu0
  %v1457 = vpop.trf.xlu0
  %v1458 = vpop.trf.xlu0
  %v1459 = vpop.trf.xlu0
  %v1460 = vpop.trf.xlu0
  %v1461 = vpop.trf.xlu0
  %v1462 = vpop.trf.xlu0
  %v1463 = vpop.trf.xlu0
  %v1464 = vpop.trf.xlu0
  %v1465 = vpop.trf.xlu0
  %v1466 = vpop.trf.xlu0
  %v1467 = vmul.f32 %v1020, %v1135
  %v1468 = vmul.f32 %v1021, %v1136
  %v1469 = vmul.f32 %v1022, %v1137
  %v1470 = vmul.f32 %v1023, %v1138
  %v1471 = vmul.f32 %v1024, %v1139
  %v1472 = vmul.f32 %v1025, %v1140
  %v1473 = vmul.f32 %v1026, %v1141
  %v1474 = vmul.f32 %v1027, %v1142
  %v1475 = vmul.f32 %v1028, %v1143
  %v1476 = vmul.f32 %v1029, %v1144
  %v1477 = vmul.f32 %v1030, %v1145
  %v1478 = vmul.f32 %v1031, %v1146
  %v1479 = vmul.f32 %v1032, %v1147
  %v1480 = vmul.f32 %v1033, %v1148
  %v1481 = vmul.f32 %v1034, %v1149
  %v1482 = vmul.f32 %v1035, %v1150
  %v1483 = vmul.f32 %v1036, %v1167
  %v1484 = vmul.f32 %v1037, %v1168
  %v1485 = vmul.f32 %v1038, %v1169
  %v1486 = vmul.f32 %v1039, %v1170
  %v1487 = vmul.f32 %v1040, %v1171
  %v1488 = vmul.f32 %v1041, %v1172
  %v1489 = vmul.f32 %v1042, %v1173
  %v1490 = vmul.f32 %v1043, %v1174
  %v1491 = vmul.f32 %v1044, %v1175
  %v1492 = vmul.f32 %v1045, %v1176
  %v1493 = vmul.f32 %v1046, %v1177
  %v1494 = vmul.f32 %v1047, %v1178
  %v1495 = vmul.f32 %v1048, %v1179
  %v1496 = vmul.f32 %v1049, %v1180
  %v1497 = vmul.f32 %v1050, %v1181
  %v1498 = vmul.f32 %v1051, %v1182
  %v1499 = vmul.f32 %v1052, %v1199
  %v1500 = vmul.f32 %v1053, %v1200
  %v1501 = vmul.f32 %v1054, %v1201
  %v1502 = vmul.f32 %v1055, %v1202
  %v1503 = vmul.f32 %v1056, %v1203
  %v1504 = vmul.f32 %v1057, %v1204
  %v1505 = vmul.f32 %v1058, %v1205
  %v1506 = vmul.f32 %v1059, %v1206
  %v1507 = vmul.f32 %v1060, %v1207
  %v1508 = vmul.f32 %v1061, %v1208
  %v1509 = vmul.f32 %v1062, %v1209
  %v1510 = vmul.f32 %v1063, %v1210
  %v1511 = vmul.f32 %v1064, %v1211
  %v1512 = vmul.f32 %v1065, %v1212
  %v1513 = vmul.f32 %v1066, %v1213
  %v1514 = vmul.f32 %v1067, %v1214
  %v1515 = vmul.f32 %v1068, %v1231
  %v1516 = vmul.f32 %v1069, %v1232
  %v1517 = vmul.f32 %v1070, %v1233
  %v1518 = vmul.f32 %v1071, %v1234
  %v1519 = vmul.f32 %v1072, %v1235
  %v1520 = vmul.f32 %v1073, %v1236
  %v1521 = vmul.f32 %v1074, %v1237
  %v1522 = vmul.f32 %v1075, %v1238
  %v1523 = vmul.f32 %v1076, %v1239
  %v1524 = vmul.f32 %v1077, %v1240
  %v1525 = vmul.f32 %v1078, %v1241
  %v1526 = vmul.f32 %v1079, %v1242
  %v1527 = vmul.f32 %v1080, %v1243
  %v1528 = vmul.f32 %v1081, %v1244
  %v1529 = vmul.f32 %v1082, %v1245
  %v1530 = vmul.f32 %v1083, %v1246
  %v1531 = vmul.f32 %v1084, %v1263
  %v1532 = vmul.f32 %v1085, %v1264
  %v1533 = vmul.f32 %v1086, %v1265
  %v1534 = vmul.f32 %v1087, %v1266
  %v1535 = vmul.f32 %v1088, %v1267
  %v1536 = vmul.f32 %v1089, %v1268
  %v1537 = vmul.f32 %v1090, %v1269
  %v1538 = vmul.f32 %v1091, %v1270
  %v1539 = vmul.f32 %v588, %v1467
  %v1540 = vmul.f32 %v589, %v1468
  %v1541 = vmul.f32 %v590, %v1469
  %v1542 = vmul.f32 %v591, %v1470
  %v1543 = vmul.f32 %v592, %v1471
  %v1544 = vmul.f32 %v593, %v1472
  %v1545 = vmul.f32 %v594, %v1473
  %v1546 = vmul.f32 %v595, %v1474
  %v1547 = vmul.f32 %v596, %v1475
  %v1548 = vmul.f32 %v597, %v1476
  %v1549 = vmul.f32 %v598, %v1477
  %v1550 = vmul.f32 %v599, %v1478
  %v1551 = vmul.f32 %v600, %v1479
  %v1552 = vmul.f32 %v601, %v1480
  %v1553 = vmul.f32 %v602, %v1481
  %v1554 = vmul.f32 %v603, %v1482
  %v1555 = vmul.f32 %v604, %v1483
  %v1556 = vmul.f32 %v605, %v1484
  %v1557 = vmul.f32 %v606, %v1485
  %v1558 = vmul.f32 %v607, %v1486
  %v1559 = vmul.f32 %v608, %v1487
  %v1560 = vmul.f32 %v609, %v1488
  %v1561 = vmul.f32 %v610, %v1489
  %v1562 = vmul.f32 %v611, %v1490
  %v1563 = vmul.f32 %v612, %v1491
  %v1564 = vmul.f32 %v613, %v1492
  %v1565 = vmul.f32 %v614, %v1493
  %v1566 = vmul.f32 %v615, %v1494
  %v1567 = vmul.f32 %v616, %v1495
  %v1568 = vmul.f32 %v617, %v1496
  %v1569 = vmul.f32 %v618, %v1497
  %v1570 = vmul.f32 %v619, %v1498
  %v1571 = vmul.f32 %v620, %v1499
  %v1572 = vmul.f32 %v621, %v1500
  %v1573 = vmul.f32 %v622, %v1501
  %v1574 = vmul.f32 %v623, %v1502
  %v1575 = vmul.f32 %v624, %v1503
  %v1576 = vmul.f32 %v625, %v1504
  %v1577 = vmul.f32 %v626, %v1505
  %v1578 = vmul.f32 %v627, %v1506
  %v1579 = vmul.f32 %v628, %v1507
  %v1580 = vmul.f32 %v629, %v1508
  %v1581 = vmul.f32 %v630, %v1509
  %v1582 = vmul.f32 %v631, %v1510
  %v1583 = vmul.f32 %v632, %v1511
  %v1584 = vmul.f32 %v633, %v1512
  %v1585 = vmul.f32 %v634, %v1513
  %v1586 = vmul.f32 %v635, %v1514
  %v1587 = vmul.f32 %v636, %v1515
  %v1588 = vmul.f32 %v637, %v1516
  %v1589 = vmul.f32 %v638, %v1517
  %v1590 = vmul.f32 %v639, %v1518
  %v1591 = vmul.f32 %v640, %v1519
  %v1592 = vmul.f32 %v641, %v1520
  %v1593 = vmul.f32 %v642, %v1521
  %v1594 = vmul.f32 %v643, %v1522
  %v1595 = vmul.f32 %v644, %v1523
  %v1596 = vmul.f32 %v645, %v1524
  %v1597 = vmul.f32 %v646, %v1525
  %v1598 = vmul.f32 %v647, %v1526
  %v1599 = vmul.f32 %v648, %v1527
  %v1600 = vmul.f32 %v649, %v1528
  %v1601 = vmul.f32 %v650, %v1529
  %v1602 = vmul.f32 %v651, %v1530
  %v1603 = vmul.f32 %v652, %v1531
  %v1604 = vmul.f32 %v653, %v1532
  %v1605 = vmul.f32 %v654, %v1533
  %v1606 = vmul.f32 %v655, %v1534
  %v1607 = vmul.f32 %v656, %v1535
  %v1608 = vmul.f32 %v657, %v1536
  %v1609 = vmul.f32 %v658, %v1537
  %v1610 = vmul.f32 %v659, %v1538
  %v1611 = vsub.f32 %v1323, %v1539
  %v1612 = vsub.f32 %v1324, %v1540
  %v1613 = vsub.f32 %v1325, %v1541
  %v1614 = vsub.f32 %v1326, %v1542
  %v1615 = vsub.f32 %v1327, %v1543
  %v1616 = vsub.f32 %v1328, %v1544
  %v1617 = vsub.f32 %v1329, %v1545
  %v1618 = vsub.f32 %v1330, %v1546
  %v1619 = vsub.f32 %v1331, %v1547
  %v1620 = vsub.f32 %v1332, %v1548
  %v1621 = vsub.f32 %v1333, %v1549
  %v1622 = vsub.f32 %v1334, %v1550
  %v1623 = vsub.f32 %v1335, %v1551
  %v1624 = vsub.f32 %v1336, %v1552
  %v1625 = vsub.f32 %v1337, %v1553
  %v1626 = vsub.f32 %v1338, %v1554
  %v1627 = vsub.f32 %v1355, %v1555
  %v1628 = vsub.f32 %v1356, %v1556
  %v1629 = vsub.f32 %v1357, %v1557
  %v1630 = vsub.f32 %v1358, %v1558
  %v1631 = vsub.f32 %v1359, %v1559
  %v1632 = vsub.f32 %v1360, %v1560
  %v1633 = vsub.f32 %v1361, %v1561
  %v1634 = vsub.f32 %v1362, %v1562
  %v1635 = vsub.f32 %v1363, %v1563
  %v1636 = vsub.f32 %v1364, %v1564
  %v1637 = vsub.f32 %v1365, %v1565
  %v1638 = vsub.f32 %v1366, %v1566
  %v1639 = vsub.f32 %v1367, %v1567
  %v1640 = vsub.f32 %v1368, %v1568
  %v1641 = vsub.f32 %v1369, %v1569
  %v1642 = vsub.f32 %v1370, %v1570
  %v1643 = vsub.f32 %v1387, %v1571
  %v1644 = vsub.f32 %v1388, %v1572
  %v1645 = vsub.f32 %v1389, %v1573
  %v1646 = vsub.f32 %v1390, %v1574
  %v1647 = vsub.f32 %v1391, %v1575
  %v1648 = vsub.f32 %v1392, %v1576
  %v1649 = vsub.f32 %v1393, %v1577
  %v1650 = vsub.f32 %v1394, %v1578
  %v1651 = vsub.f32 %v1395, %v1579
  %v1652 = vsub.f32 %v1396, %v1580
  %v1653 = vsub.f32 %v1397, %v1581
  %v1654 = vsub.f32 %v1398, %v1582
  %v1655 = vsub.f32 %v1399, %v1583
  %v1656 = vsub.f32 %v1400, %v1584
  %v1657 = vsub.f32 %v1401, %v1585
  %v1658 = vsub.f32 %v1402, %v1586
  %v1659 = vsub.f32 %v1419, %v1587
  %v1660 = vsub.f32 %v1420, %v1588
  %v1661 = vsub.f32 %v1421, %v1589
  %v1662 = vsub.f32 %v1422, %v1590
  %v1663 = vsub.f32 %v1423, %v1591
  %v1664 = vsub.f32 %v1424, %v1592
  %v1665 = vsub.f32 %v1425, %v1593
  %v1666 = vsub.f32 %v1426, %v1594
  %v1667 = vsub.f32 %v1427, %v1595
  %v1668 = vsub.f32 %v1428, %v1596
  %v1669 = vsub.f32 %v1429, %v1597
  %v1670 = vsub.f32 %v1430, %v1598
  %v1671 = vsub.f32 %v1431, %v1599
  %v1672 = vsub.f32 %v1432, %v1600
  %v1673 = vsub.f32 %v1433, %v1601
  %v1674 = vsub.f32 %v1434, %v1602
  %v1675 = vsub.f32 %v1451, %v1603
  %v1676 = vsub.f32 %v1452, %v1604
  %v1677 = vsub.f32 %v1453, %v1605
  %v1678 = vsub.f32 %v1454, %v1606
  %v1679 = vsub.f32 %v1455, %v1607
  %v1680 = vsub.f32 %v1456, %v1608
  %v1681 = vsub.f32 %v1457, %v1609
  %v1682 = vsub.f32 %v1458, %v1610
  %1684 = vset.pattern.permute.xlu0 0
  %1685 = vperm.xlu0 %1684, %v1467
  %v1686 = vpop.permute.xlu0 %1685
  %1689 = vset.pattern.permute.xlu0 0
  %1690 = vperm.xlu0 %1689, %v1468
  %v1691 = vpop.permute.xlu0 %1690
  %1694 = vset.pattern.permute.xlu0 0
  %1695 = vperm.xlu0 %1694, %v1469
  %v1696 = vpop.permute.xlu0 %1695
  %1699 = vset.pattern.permute.xlu0 0
  %1700 = vperm.xlu0 %1699, %v1470
  %v1701 = vpop.permute.xlu0 %1700
  %1704 = vset.pattern.permute.xlu0 0
  %1705 = vperm.xlu0 %1704, %v1471
  %v1706 = vpop.permute.xlu0 %1705
  %1709 = vset.pattern.permute.xlu0 0
  %1710 = vperm.xlu0 %1709, %v1472
  %v1711 = vpop.permute.xlu0 %1710
  %1714 = vset.pattern.permute.xlu0 0
  %1715 = vperm.xlu0 %1714, %v1473
  %v1716 = vpop.permute.xlu0 %1715
  %1719 = vset.pattern.permute.xlu0 0
  %1720 = vperm.xlu0 %1719, %v1474
  %v1721 = vpop.permute.xlu0 %1720
  %1724 = vset.pattern.permute.xlu0 0
  %1725 = vperm.xlu0 %1724, %v1475
  %v1726 = vpop.permute.xlu0 %1725
  %1729 = vset.pattern.permute.xlu0 0
  %1730 = vperm.xlu0 %1729, %v1476
  %v1731 = vpop.permute.xlu0 %1730
  %1734 = vset.pattern.permute.xlu0 0
  %1735 = vperm.xlu0 %1734, %v1477
  %v1736 = vpop.permute.xlu0 %1735
  %1739 = vset.pattern.permute.xlu0 0
  %1740 = vperm.xlu0 %1739, %v1478
  %v1741 = vpop.permute.xlu0 %1740
  %1744 = vset.pattern.permute.xlu0 0
  %1745 = vperm.xlu0 %1744, %v1479
  %v1746 = vpop.permute.xlu0 %1745
  %1749 = vset.pattern.permute.xlu0 0
  %1750 = vperm.xlu0 %1749, %v1480
  %v1751 = vpop.permute.xlu0 %1750
  %1754 = vset.pattern.permute.xlu0 0
  %1755 = vperm.xlu0 %1754, %v1481
  %v1756 = vpop.permute.xlu0 %1755
  %1759 = vset.pattern.permute.xlu0 0
  %1760 = vperm.xlu0 %1759, %v1482
  %v1761 = vpop.permute.xlu0 %1760
  %1764 = vset.pattern.permute.xlu0 0
  %1765 = vperm.xlu0 %1764, %v1483
  %v1766 = vpop.permute.xlu0 %1765
  %1769 = vset.pattern.permute.xlu0 0
  %1770 = vperm.xlu0 %1769, %v1484
  %v1771 = vpop.permute.xlu0 %1770
  %1774 = vset.pattern.permute.xlu0 0
  %1775 = vperm.xlu0 %1774, %v1485
  %v1776 = vpop.permute.xlu0 %1775
  %1779 = vset.pattern.permute.xlu0 0
  %1780 = vperm.xlu0 %1779, %v1486
  %v1781 = vpop.permute.xlu0 %1780
  %1784 = vset.pattern.permute.xlu0 0
  %1785 = vperm.xlu0 %1784, %v1487
  %v1786 = vpop.permute.xlu0 %1785
  %1789 = vset.pattern.permute.xlu0 0
  %1790 = vperm.xlu0 %1789, %v1488
  %v1791 = vpop.permute.xlu0 %1790
  %1794 = vset.pattern.permute.xlu0 0
  %1795 = vperm.xlu0 %1794, %v1489
  %v1796 = vpop.permute.xlu0 %1795
  %1799 = vset.pattern.permute.xlu0 0
  %1800 = vperm.xlu0 %1799, %v1490
  %v1801 = vpop.permute.xlu0 %1800
  %1804 = vset.pattern.permute.xlu0 0
  %1805 = vperm.xlu0 %1804, %v1491
  %v1806 = vpop.permute.xlu0 %1805
  %1809 = vset.pattern.permute.xlu0 0
  %1810 = vperm.xlu0 %1809, %v1492
  %v1811 = vpop.permute.xlu0 %1810
  %1814 = vset.pattern.permute.xlu0 0
  %1815 = vperm.xlu0 %1814, %v1493
  %v1816 = vpop.permute.xlu0 %1815
  %1819 = vset.pattern.permute.xlu0 0
  %1820 = vperm.xlu0 %1819, %v1494
  %v1821 = vpop.permute.xlu0 %1820
  %1824 = vset.pattern.permute.xlu0 0
  %1825 = vperm.xlu0 %1824, %v1495
  %v1826 = vpop.permute.xlu0 %1825
  %1829 = vset.pattern.permute.xlu0 0
  %1830 = vperm.xlu0 %1829, %v1496
  %v1831 = vpop.permute.xlu0 %1830
  %1834 = vset.pattern.permute.xlu0 0
  %1835 = vperm.xlu0 %1834, %v1497
  %v1836 = vpop.permute.xlu0 %1835
  %1839 = vset.pattern.permute.xlu0 0
  %1840 = vperm.xlu0 %1839, %v1498
  %v1841 = vpop.permute.xlu0 %1840
  %1844 = vset.pattern.permute.xlu0 0
  %1845 = vperm.xlu0 %1844, %v1499
  %v1846 = vpop.permute.xlu0 %1845
  %1849 = vset.pattern.permute.xlu0 0
  %1850 = vperm.xlu0 %1849, %v1500
  %v1851 = vpop.permute.xlu0 %1850
  %1854 = vset.pattern.permute.xlu0 0
  %1855 = vperm.xlu0 %1854, %v1501
  %v1856 = vpop.permute.xlu0 %1855
  %1859 = vset.pattern.permute.xlu0 0
  %1860 = vperm.xlu0 %1859, %v1502
  %v1861 = vpop.permute.xlu0 %1860
  %1864 = vset.pattern.permute.xlu0 0
  %1865 = vperm.xlu0 %1864, %v1503
  %v1866 = vpop.permute.xlu0 %1865
  %1869 = vset.pattern.permute.xlu0 0
  %1870 = vperm.xlu0 %1869, %v1504
  %v1871 = vpop.permute.xlu0 %1870
  %1874 = vset.pattern.permute.xlu0 0
  %1875 = vperm.xlu0 %1874, %v1505
  %v1876 = vpop.permute.xlu0 %1875
  %1879 = vset.pattern.permute.xlu0 0
  %1880 = vperm.xlu0 %1879, %v1506
  %v1881 = vpop.permute.xlu0 %1880
  %1884 = vset.pattern.permute.xlu0 0
  %1885 = vperm.xlu0 %1884, %v1507
  %v1886 = vpop.permute.xlu0 %1885
  %1889 = vset.pattern.permute.xlu0 0
  %1890 = vperm.xlu0 %1889, %v1508
  %v1891 = vpop.permute.xlu0 %1890
  %1894 = vset.pattern.permute.xlu0 0
  %1895 = vperm.xlu0 %1894, %v1509
  %v1896 = vpop.permute.xlu0 %1895
  %1899 = vset.pattern.permute.xlu0 0
  %1900 = vperm.xlu0 %1899, %v1510
  %v1901 = vpop.permute.xlu0 %1900
  %1904 = vset.pattern.permute.xlu0 0
  %1905 = vperm.xlu0 %1904, %v1511
  %v1906 = vpop.permute.xlu0 %1905
  %1909 = vset.pattern.permute.xlu0 0
  %1910 = vperm.xlu0 %1909, %v1512
  %v1911 = vpop.permute.xlu0 %1910
  %1914 = vset.pattern.permute.xlu0 0
  %1915 = vperm.xlu0 %1914, %v1513
  %v1916 = vpop.permute.xlu0 %1915
  %1919 = vset.pattern.permute.xlu0 0
  %1920 = vperm.xlu0 %1919, %v1514
  %v1921 = vpop.permute.xlu0 %1920
  %1924 = vset.pattern.permute.xlu0 0
  %1925 = vperm.xlu0 %1924, %v1515
  %v1926 = vpop.permute.xlu0 %1925
  %1929 = vset.pattern.permute.xlu0 0
  %1930 = vperm.xlu0 %1929, %v1516
  %v1931 = vpop.permute.xlu0 %1930
  %1934 = vset.pattern.permute.xlu0 0
  %1935 = vperm.xlu0 %1934, %v1517
  %v1936 = vpop.permute.xlu0 %1935
  %1939 = vset.pattern.permute.xlu0 0
  %1940 = vperm.xlu0 %1939, %v1518
  %v1941 = vpop.permute.xlu0 %1940
  %1944 = vset.pattern.permute.xlu0 0
  %1945 = vperm.xlu0 %1944, %v1519
  %v1946 = vpop.permute.xlu0 %1945
  %1949 = vset.pattern.permute.xlu0 0
  %1950 = vperm.xlu0 %1949, %v1520
  %v1951 = vpop.permute.xlu0 %1950
  %1954 = vset.pattern.permute.xlu0 0
  %1955 = vperm.xlu0 %1954, %v1521
  %v1956 = vpop.permute.xlu0 %1955
  %1959 = vset.pattern.permute.xlu0 0
  %1960 = vperm.xlu0 %1959, %v1522
  %v1961 = vpop.permute.xlu0 %1960
  %1964 = vset.pattern.permute.xlu0 0
  %1965 = vperm.xlu0 %1964, %v1523
  %v1966 = vpop.permute.xlu0 %1965
  %1969 = vset.pattern.permute.xlu0 0
  %1970 = vperm.xlu0 %1969, %v1524
  %v1971 = vpop.permute.xlu0 %1970
  %1974 = vset.pattern.permute.xlu0 0
  %1975 = vperm.xlu0 %1974, %v1525
  %v1976 = vpop.permute.xlu0 %1975
  %1979 = vset.pattern.permute.xlu0 0
  %1980 = vperm.xlu0 %1979, %v1526
  %v1981 = vpop.permute.xlu0 %1980
  %1984 = vset.pattern.permute.xlu0 0
  %1985 = vperm.xlu0 %1984, %v1527
  %v1986 = vpop.permute.xlu0 %1985
  %1989 = vset.pattern.permute.xlu0 0
  %1990 = vperm.xlu0 %1989, %v1528
  %v1991 = vpop.permute.xlu0 %1990
  %1994 = vset.pattern.permute.xlu0 0
  %1995 = vperm.xlu0 %1994, %v1529
  %v1996 = vpop.permute.xlu0 %1995
  %1999 = vset.pattern.permute.xlu0 0
  %2000 = vperm.xlu0 %1999, %v1530
  %v2001 = vpop.permute.xlu0 %2000
  %2004 = vset.pattern.permute.xlu0 0
  %2005 = vperm.xlu0 %2004, %v1531
  %v2006 = vpop.permute.xlu0 %2005
  %2009 = vset.pattern.permute.xlu0 0
  %2010 = vperm.xlu0 %2009, %v1532
  %v2011 = vpop.permute.xlu0 %2010
  %2014 = vset.pattern.permute.xlu0 0
  %2015 = vperm.xlu0 %2014, %v1533
  %v2016 = vpop.permute.xlu0 %2015
  %2019 = vset.pattern.permute.xlu0 0
  %2020 = vperm.xlu0 %2019, %v1534
  %v2021 = vpop.permute.xlu0 %2020
  %2024 = vset.pattern.permute.xlu0 0
  %2025 = vperm.xlu0 %2024, %v1535
  %v2026 = vpop.permute.xlu0 %2025
  %2029 = vset.pattern.permute.xlu0 0
  %2030 = vperm.xlu0 %2029, %v1536
  %v2031 = vpop.permute.xlu0 %2030
  %2034 = vset.pattern.permute.xlu0 0
  %2035 = vperm.xlu0 %2034, %v1537
  %v2036 = vpop.permute.xlu0 %2035
  %2039 = vset.pattern.permute.xlu0 0
  %2040 = vperm.xlu0 %2039, %v1538
  %v2041 = vpop.permute.xlu0 %2040
  %v2043 = vmul.f32 %v11, %v1686
  %v2044 = vmul.f32 %v12, %v1691
  %v2045 = vmul.f32 %v13, %v1696
  %v2046 = vmul.f32 %v14, %v1701
  %v2047 = vmul.f32 %v15, %v1706
  %v2048 = vmul.f32 %v16, %v1711
  %v2049 = vmul.f32 %v17, %v1716
  %v2050 = vmul.f32 %v18, %v1721
  %v2051 = vmul.f32 %v19, %v1726
  %v2052 = vmul.f32 %v20, %v1731
  %v2053 = vmul.f32 %v21, %v1736
  %v2054 = vmul.f32 %v22, %v1741
  %v2055 = vmul.f32 %v23, %v1746
  %v2056 = vmul.f32 %v24, %v1751
  %v2057 = vmul.f32 %v25, %v1756
  %v2058 = vmul.f32 %v26, %v1761
  %v2059 = vmul.f32 %v27, %v1766
  %v2060 = vmul.f32 %v28, %v1771
  %v2061 = vmul.f32 %v29, %v1776
  %v2062 = vmul.f32 %v30, %v1781
  %v2063 = vmul.f32 %v31, %v1786
  %v2064 = vmul.f32 %v32, %v1791
  %v2065 = vmul.f32 %v33, %v1796
  %v2066 = vmul.f32 %v34, %v1801
  %v2067 = vmul.f32 %v35, %v1806
  %v2068 = vmul.f32 %v36, %v1811
  %v2069 = vmul.f32 %v37, %v1816
  %v2070 = vmul.f32 %v38, %v1821
  %v2071 = vmul.f32 %v39, %v1826
  %v2072 = vmul.f32 %v40, %v1831
  %v2073 = vmul.f32 %v41, %v1836
  %v2074 = vmul.f32 %v42, %v1841
  %v2075 = vmul.f32 %v43, %v1846
  %v2076 = vmul.f32 %v44, %v1851
  %v2077 = vmul.f32 %v45, %v1856
  %v2078 = vmul.f32 %v46, %v1861
  %v2079 = vmul.f32 %v47, %v1866
  %v2080 = vmul.f32 %v48, %v1871
  %v2081 = vmul.f32 %v49, %v1876
  %v2082 = vmul.f32 %v50, %v1881
  %v2083 = vmul.f32 %v51, %v1886
  %v2084 = vmul.f32 %v52, %v1891
  %v2085 = vmul.f32 %v53, %v1896
  %v2086 = vmul.f32 %v54, %v1901
  %v2087 = vmul.f32 %v55, %v1906
  %v2088 = vmul.f32 %v56, %v1911
  %v2089 = vmul.f32 %v57, %v1916
  %v2090 = vmul.f32 %v58, %v1921
  %v2091 = vmul.f32 %v59, %v1926
  %v2092 = vmul.f32 %v60, %v1931
  %v2093 = vmul.f32 %v61, %v1936
  %v2094 = vmul.f32 %v62, %v1941
  %v2095 = vmul.f32 %v63, %v1946
  %v2096 = vmul.f32 %v64, %v1951
  %v2097 = vmul.f32 %v65, %v1956
  %v2098 = vmul.f32 %v66, %v1961
  %v2099 = vmul.f32 %v67, %v1966
  %v2100 = vmul.f32 %v68, %v1971
  %v2101 = vmul.f32 %v69, %v1976
  %v2102 = vmul.f32 %v70, %v1981
  %v2103 = vmul.f32 %v71, %v1986
  %v2104 = vmul.f32 %v72, %v1991
  %v2105 = vmul.f32 %v73, %v1996
  %v2106 = vmul.f32 %v74, %v2001
  %v2107 = vmul.f32 %v75, %v2006
  %v2108 = vmul.f32 %v76, %v2011
  %v2109 = vmul.f32 %v77, %v2016
  %v2110 = vmul.f32 %v78, %v2021
  %v2111 = vmul.f32 %v79, %v2026
  %v2112 = vmul.f32 %v80, %v2031
  %v2113 = vmul.f32 %v81, %v2036
  %v2114 = vmul.f32 %v82, %v2041
  %2116 = vset.pattern.permute.xlu0 0
  %2117 = vperm.xlu0 %2116, %v1611
  %v2118 = vpop.permute.xlu0 %2117
  %2121 = vset.pattern.permute.xlu0 0
  %2122 = vperm.xlu0 %2121, %v1612
  %v2123 = vpop.permute.xlu0 %2122
  %2126 = vset.pattern.permute.xlu0 0
  %2127 = vperm.xlu0 %2126, %v1613
  %v2128 = vpop.permute.xlu0 %2127
  %2131 = vset.pattern.permute.xlu0 0
  %2132 = vperm.xlu0 %2131, %v1614
  %v2133 = vpop.permute.xlu0 %2132
  %2136 = vset.pattern.permute.xlu0 0
  %2137 = vperm.xlu0 %2136, %v1615
  %v2138 = vpop.permute.xlu0 %2137
  %2141 = vset.pattern.permute.xlu0 0
  %2142 = vperm.xlu0 %2141, %v1616
  %v2143 = vpop.permute.xlu0 %2142
  %2146 = vset.pattern.permute.xlu0 0
  %2147 = vperm.xlu0 %2146, %v1617
  %v2148 = vpop.permute.xlu0 %2147
  %2151 = vset.pattern.permute.xlu0 0
  %2152 = vperm.xlu0 %2151, %v1618
  %v2153 = vpop.permute.xlu0 %2152
  %2156 = vset.pattern.permute.xlu0 0
  %2157 = vperm.xlu0 %2156, %v1619
  %v2158 = vpop.permute.xlu0 %2157
  %2161 = vset.pattern.permute.xlu0 0
  %2162 = vperm.xlu0 %2161, %v1620
  %v2163 = vpop.permute.xlu0 %2162
  %2166 = vset.pattern.permute.xlu0 0
  %2167 = vperm.xlu0 %2166, %v1621
  %v2168 = vpop.permute.xlu0 %2167
  %2171 = vset.pattern.permute.xlu0 0
  %2172 = vperm.xlu0 %2171, %v1622
  %v2173 = vpop.permute.xlu0 %2172
  %2176 = vset.pattern.permute.xlu0 0
  %2177 = vperm.xlu0 %2176, %v1623
  %v2178 = vpop.permute.xlu0 %2177
  %2181 = vset.pattern.permute.xlu0 0
  %2182 = vperm.xlu0 %2181, %v1624
  %v2183 = vpop.permute.xlu0 %2182
  %2186 = vset.pattern.permute.xlu0 0
  %2187 = vperm.xlu0 %2186, %v1625
  %v2188 = vpop.permute.xlu0 %2187
  %2191 = vset.pattern.permute.xlu0 0
  %2192 = vperm.xlu0 %2191, %v1626
  %v2193 = vpop.permute.xlu0 %2192
  %2196 = vset.pattern.permute.xlu0 0
  %2197 = vperm.xlu0 %2196, %v1627
  %v2198 = vpop.permute.xlu0 %2197
  %2201 = vset.pattern.permute.xlu0 0
  %2202 = vperm.xlu0 %2201, %v1628
  %v2203 = vpop.permute.xlu0 %2202
  %2206 = vset.pattern.permute.xlu0 0
  %2207 = vperm.xlu0 %2206, %v1629
  %v2208 = vpop.permute.xlu0 %2207
  %2211 = vset.pattern.permute.xlu0 0
  %2212 = vperm.xlu0 %2211, %v1630
  %v2213 = vpop.permute.xlu0 %2212
  %2216 = vset.pattern.permute.xlu0 0
  %2217 = vperm.xlu0 %2216, %v1631
  %v2218 = vpop.permute.xlu0 %2217
  %2221 = vset.pattern.permute.xlu0 0
  %2222 = vperm.xlu0 %2221, %v1632
  %v2223 = vpop.permute.xlu0 %2222
  %2226 = vset.pattern.permute.xlu0 0
  %2227 = vperm.xlu0 %2226, %v1633
  %v2228 = vpop.permute.xlu0 %2227
  %2231 = vset.pattern.permute.xlu0 0
  %2232 = vperm.xlu0 %2231, %v1634
  %v2233 = vpop.permute.xlu0 %2232
  %2236 = vset.pattern.permute.xlu0 0
  %2237 = vperm.xlu0 %2236, %v1635
  %v2238 = vpop.permute.xlu0 %2237
  %2241 = vset.pattern.permute.xlu0 0
  %2242 = vperm.xlu0 %2241, %v1636
  %v2243 = vpop.permute.xlu0 %2242
  %2246 = vset.pattern.permute.xlu0 0
  %2247 = vperm.xlu0 %2246, %v1637
  %v2248 = vpop.permute.xlu0 %2247
  %2251 = vset.pattern.permute.xlu0 0
  %2252 = vperm.xlu0 %2251, %v1638
  %v2253 = vpop.permute.xlu0 %2252
  %2256 = vset.pattern.permute.xlu0 0
  %2257 = vperm.xlu0 %2256, %v1639
  %v2258 = vpop.permute.xlu0 %2257
  %2261 = vset.pattern.permute.xlu0 0
  %2262 = vperm.xlu0 %2261, %v1640
  %v2263 = vpop.permute.xlu0 %2262
  %2266 = vset.pattern.permute.xlu0 0
  %2267 = vperm.xlu0 %2266, %v1641
  %v2268 = vpop.permute.xlu0 %2267
  %2271 = vset.pattern.permute.xlu0 0
  %2272 = vperm.xlu0 %2271, %v1642
  %v2273 = vpop.permute.xlu0 %2272
  %2276 = vset.pattern.permute.xlu0 0
  %2277 = vperm.xlu0 %2276, %v1643
  %v2278 = vpop.permute.xlu0 %2277
  %2281 = vset.pattern.permute.xlu0 0
  %2282 = vperm.xlu0 %2281, %v1644
  %v2283 = vpop.permute.xlu0 %2282
  %2286 = vset.pattern.permute.xlu0 0
  %2287 = vperm.xlu0 %2286, %v1645
  %v2288 = vpop.permute.xlu0 %2287
  %2291 = vset.pattern.permute.xlu0 0
  %2292 = vperm.xlu0 %2291, %v1646
  %v2293 = vpop.permute.xlu0 %2292
  %2296 = vset.pattern.permute.xlu0 0
  %2297 = vperm.xlu0 %2296, %v1647
  %v2298 = vpop.permute.xlu0 %2297
  %2301 = vset.pattern.permute.xlu0 0
  %2302 = vperm.xlu0 %2301, %v1648
  %v2303 = vpop.permute.xlu0 %2302
  %2306 = vset.pattern.permute.xlu0 0
  %2307 = vperm.xlu0 %2306, %v1649
  %v2308 = vpop.permute.xlu0 %2307
  %2311 = vset.pattern.permute.xlu0 0
  %2312 = vperm.xlu0 %2311, %v1650
  %v2313 = vpop.permute.xlu0 %2312
  %2316 = vset.pattern.permute.xlu0 0
  %2317 = vperm.xlu0 %2316, %v1651
  %v2318 = vpop.permute.xlu0 %2317
  %2321 = vset.pattern.permute.xlu0 0
  %2322 = vperm.xlu0 %2321, %v1652
  %v2323 = vpop.permute.xlu0 %2322
  %2326 = vset.pattern.permute.xlu0 0
  %2327 = vperm.xlu0 %2326, %v1653
  %v2328 = vpop.permute.xlu0 %2327
  %2331 = vset.pattern.permute.xlu0 0
  %2332 = vperm.xlu0 %2331, %v1654
  %v2333 = vpop.permute.xlu0 %2332
  %2336 = vset.pattern.permute.xlu0 0
  %2337 = vperm.xlu0 %2336, %v1655
  %v2338 = vpop.permute.xlu0 %2337
  %2341 = vset.pattern.permute.xlu0 0
  %2342 = vperm.xlu0 %2341, %v1656
  %v2343 = vpop.permute.xlu0 %2342
  %2346 = vset.pattern.permute.xlu0 0
  %2347 = vperm.xlu0 %2346, %v1657
  %v2348 = vpop.permute.xlu0 %2347
  %2351 = vset.pattern.permute.xlu0 0
  %2352 = vperm.xlu0 %2351, %v1658
  %v2353 = vpop.permute.xlu0 %2352
  %2356 = vset.pattern.permute.xlu0 0
  %2357 = vperm.xlu0 %2356, %v1659
  %v2358 = vpop.permute.xlu0 %2357
  %2361 = vset.pattern.permute.xlu0 0
  %2362 = vperm.xlu0 %2361, %v1660
  %v2363 = vpop.permute.xlu0 %2362
  %2366 = vset.pattern.permute.xlu0 0
  %2367 = vperm.xlu0 %2366, %v1661
  %v2368 = vpop.permute.xlu0 %2367
  %2371 = vset.pattern.permute.xlu0 0
  %2372 = vperm.xlu0 %2371, %v1662
  %v2373 = vpop.permute.xlu0 %2372
  %2376 = vset.pattern.permute.xlu0 0
  %2377 = vperm.xlu0 %2376, %v1663
  %v2378 = vpop.permute.xlu0 %2377
  %2381 = vset.pattern.permute.xlu0 0
  %2382 = vperm.xlu0 %2381, %v1664
  %v2383 = vpop.permute.xlu0 %2382
  %2386 = vset.pattern.permute.xlu0 0
  %2387 = vperm.xlu0 %2386, %v1665
  %v2388 = vpop.permute.xlu0 %2387
  %2391 = vset.pattern.permute.xlu0 0
  %2392 = vperm.xlu0 %2391, %v1666
  %v2393 = vpop.permute.xlu0 %2392
  %2396 = vset.pattern.permute.xlu0 0
  %2397 = vperm.xlu0 %2396, %v1667
  %v2398 = vpop.permute.xlu0 %2397
  %2401 = vset.pattern.permute.xlu0 0
  %2402 = vperm.xlu0 %2401, %v1668
  %v2403 = vpop.permute.xlu0 %2402
  %2406 = vset.pattern.permute.xlu0 0
  %2407 = vperm.xlu0 %2406, %v1669
  %v2408 = vpop.permute.xlu0 %2407
  %2411 = vset.pattern.permute.xlu0 0
  %2412 = vperm.xlu0 %2411, %v1670
  %v2413 = vpop.permute.xlu0 %2412
  %2416 = vset.pattern.permute.xlu0 0
  %2417 = vperm.xlu0 %2416, %v1671
  %v2418 = vpop.permute.xlu0 %2417
  %2421 = vset.pattern.permute.xlu0 0
  %2422 = vperm.xlu0 %2421, %v1672
  %v2423 = vpop.permute.xlu0 %2422
  %2426 = vset.pattern.permute.xlu0 0
  %2427 = vperm.xlu0 %2426, %v1673
  %v2428 = vpop.permute.xlu0 %2427
  %2431 = vset.pattern.permute.xlu0 0
  %2432 = vperm.xlu0 %2431, %v1674
  %v2433 = vpop.permute.xlu0 %2432
  %2436 = vset.pattern.permute.xlu0 0
  %2437 = vperm.xlu0 %2436, %v1675
  %v2438 = vpop.permute.xlu0 %2437
  %2441 = vset.pattern.permute.xlu0 0
  %2442 = vperm.xlu0 %2441, %v1676
  %v2443 = vpop.permute.xlu0 %2442
  %2446 = vset.pattern.permute.xlu0 0
  %2447 = vperm.xlu0 %2446, %v1677
  %v2448 = vpop.permute.xlu0 %2447
  %2451 = vset.pattern.permute.xlu0 0
  %2452 = vperm.xlu0 %2451, %v1678
  %v2453 = vpop.permute.xlu0 %2452
  %2456 = vset.pattern.permute.xlu0 0
  %2457 = vperm.xlu0 %2456, %v1679
  %v2458 = vpop.permute.xlu0 %2457
  %2461 = vset.pattern.permute.xlu0 0
  %2462 = vperm.xlu0 %2461, %v1680
  %v2463 = vpop.permute.xlu0 %2462
  %2466 = vset.pattern.permute.xlu0 0
  %2467 = vperm.xlu0 %2466, %v1681
  %v2468 = vpop.permute.xlu0 %2467
  %2471 = vset.pattern.permute.xlu0 0
  %2472 = vperm.xlu0 %2471, %v1682
  %v2473 = vpop.permute.xlu0 %2472
  %v2475 = vadd.f32 %v2043, %v2118
  %v2476 = vadd.f32 %v2044, %v2123
  %v2477 = vadd.f32 %v2045, %v2128
  %v2478 = vadd.f32 %v2046, %v2133
  %v2479 = vadd.f32 %v2047, %v2138
  %v2480 = vadd.f32 %v2048, %v2143
  %v2481 = vadd.f32 %v2049, %v2148
  %v2482 = vadd.f32 %v2050, %v2153
  %v2483 = vadd.f32 %v2051, %v2158
  %v2484 = vadd.f32 %v2052, %v2163
  %v2485 = vadd.f32 %v2053, %v2168
  %v2486 = vadd.f32 %v2054, %v2173
  %v2487 = vadd.f32 %v2055, %v2178
  %v2488 = vadd.f32 %v2056, %v2183
  %v2489 = vadd.f32 %v2057, %v2188
  %v2490 = vadd.f32 %v2058, %v2193
  %v2491 = vadd.f32 %v2059, %v2198
  %v2492 = vadd.f32 %v2060, %v2203
  %v2493 = vadd.f32 %v2061, %v2208
  %v2494 = vadd.f32 %v2062, %v2213
  %v2495 = vadd.f32 %v2063, %v2218
  %v2496 = vadd.f32 %v2064, %v2223
  %v2497 = vadd.f32 %v2065, %v2228
  %v2498 = vadd.f32 %v2066, %v2233
  %v2499 = vadd.f32 %v2067, %v2238
  %v2500 = vadd.f32 %v2068, %v2243
  %v2501 = vadd.f32 %v2069, %v2248
  %v2502 = vadd.f32 %v2070, %v2253
  %v2503 = vadd.f32 %v2071, %v2258
  %v2504 = vadd.f32 %v2072, %v2263
  %v2505 = vadd.f32 %v2073, %v2268
  %v2506 = vadd.f32 %v2074, %v2273
  %v2507 = vadd.f32 %v2075, %v2278
  %v2508 = vadd.f32 %v2076, %v2283
  %v2509 = vadd.f32 %v2077, %v2288
  %v2510 = vadd.f32 %v2078, %v2293
  %v2511 = vadd.f32 %v2079, %v2298
  %v2512 = vadd.f32 %v2080, %v2303
  %v2513 = vadd.f32 %v2081, %v2308
  %v2514 = vadd.f32 %v2082, %v2313
  %v2515 = vadd.f32 %v2083, %v2318
  %v2516 = vadd.f32 %v2084, %v2323
  %v2517 = vadd.f32 %v2085, %v2328
  %v2518 = vadd.f32 %v2086, %v2333
  %v2519 = vadd.f32 %v2087, %v2338
  %v2520 = vadd.f32 %v2088, %v2343
  %v2521 = vadd.f32 %v2089, %v2348
  %v2522 = vadd.f32 %v2090, %v2353
  %v2523 = vadd.f32 %v2091, %v2358
  %v2524 = vadd.f32 %v2092, %v2363
  %v2525 = vadd.f32 %v2093, %v2368
  %v2526 = vadd.f32 %v2094, %v2373
  %v2527 = vadd.f32 %v2095, %v2378
  %v2528 = vadd.f32 %v2096, %v2383
  %v2529 = vadd.f32 %v2097, %v2388
  %v2530 = vadd.f32 %v2098, %v2393
  %v2531 = vadd.f32 %v2099, %v2398
  %v2532 = vadd.f32 %v2100, %v2403
  %v2533 = vadd.f32 %v2101, %v2408
  %v2534 = vadd.f32 %v2102, %v2413
  %v2535 = vadd.f32 %v2103, %v2418
  %v2536 = vadd.f32 %v2104, %v2423
  %v2537 = vadd.f32 %v2105, %v2428
  %v2538 = vadd.f32 %v2106, %v2433
  %v2539 = vadd.f32 %v2107, %v2438
  %v2540 = vadd.f32 %v2108, %v2443
  %v2541 = vadd.f32 %v2109, %v2448
  %v2542 = vadd.f32 %v2110, %v2453
  %v2543 = vadd.f32 %v2111, %v2458
  %v2544 = vadd.f32 %v2112, %v2463
  %v2545 = vadd.f32 %v2113, %v2468
  %v2546 = vadd.f32 %v2114, %v2473
  %2547 = vst.msk [vmem:[%s2] sm:$0xff] %vm83, %v2475
  %2548 = vst.msk [vmem:[%s2 + $0x8] sm:$0xff] %vm83, %v2476
  %2549 = vst.msk [vmem:[%s2 + $0x10] sm:$0xff] %vm83, %v2477
  %2550 = vst.msk [vmem:[%s2 + $0x18] sm:$0xff] %vm83, %v2478
  %2551 = vst.msk [vmem:[%s2 + $0x20] sm:$0xff] %vm83, %v2479
  %2552 = vst.msk [vmem:[%s2 + $0x28] sm:$0xff] %vm83, %v2480
  %2553 = vst.msk [vmem:[%s2 + $0x30] sm:$0xff] %vm83, %v2481
  %2554 = vst.msk [vmem:[%s2 + $0x38] sm:$0xff] %vm83, %v2482
  %2555 = vst.msk [vmem:[%s2 + $0x40] sm:$0xff] %vm83, %v2483
  %2556 = vst.msk [vmem:[%s2 + $0x48] sm:$0xff] %vm83, %v2484
  %2557 = vst.msk [vmem:[%s2 + $0x50] sm:$0xff] %vm83, %v2485
  %2558 = vst.msk [vmem:[%s2 + $0x58] sm:$0xff] %vm83, %v2486
  %2559 = vst.msk [vmem:[%s2 + $0x60] sm:$0xff] %vm83, %v2487
  %2560 = vst.msk [vmem:[%s2 + $0x68] sm:$0xff] %vm83, %v2488
  %2561 = vst.msk [vmem:[%s2 + $0x70] sm:$0xff] %vm83, %v2489
  %2562 = vst.msk [vmem:[%s2 + $0x78] sm:$0xff] %vm83, %v2490
  %2563 = vst.msk [vmem:[%s2 + $0x80] sm:$0xff] %vm83, %v2491
  %2564 = vst.msk [vmem:[%s2 + $0x88] sm:$0xff] %vm83, %v2492
  %2565 = vst.msk [vmem:[%s2 + $0x90] sm:$0xff] %vm83, %v2493
  %2566 = vst.msk [vmem:[%s2 + $0x98] sm:$0xff] %vm83, %v2494
  %2567 = vst.msk [vmem:[%s2 + $0xa0] sm:$0xff] %vm83, %v2495
  %2568 = vst.msk [vmem:[%s2 + $0xa8] sm:$0xff] %vm83, %v2496
  %2569 = vst.msk [vmem:[%s2 + $0xb0] sm:$0xff] %vm83, %v2497
  %2570 = vst.msk [vmem:[%s2 + $0xb8] sm:$0xff] %vm83, %v2498
  %2571 = vst.msk [vmem:[%s2 + $0xc0] sm:$0xff] %vm83, %v2499
  %2572 = vst.msk [vmem:[%s2 + $0xc8] sm:$0xff] %vm83, %v2500
  %2573 = vst.msk [vmem:[%s2 + $0xd0] sm:$0xff] %vm83, %v2501
  %2574 = vst.msk [vmem:[%s2 + $0xd8] sm:$0xff] %vm83, %v2502
  %2575 = vst.msk [vmem:[%s2 + $0xe0] sm:$0xff] %vm83, %v2503
  %2576 = vst.msk [vmem:[%s2 + $0xe8] sm:$0xff] %vm83, %v2504
  %2577 = vst.msk [vmem:[%s2 + $0xf0] sm:$0xff] %vm83, %v2505
  %2578 = vst.msk [vmem:[%s2 + $0xf8] sm:$0xff] %vm83, %v2506
  %2579 = vst.msk [vmem:[%s2 + $0x100] sm:$0xff] %vm83, %v2507
  %2580 = vst.msk [vmem:[%s2 + $0x108] sm:$0xff] %vm83, %v2508
  %2581 = vst.msk [vmem:[%s2 + $0x110] sm:$0xff] %vm83, %v2509
  %2582 = vst.msk [vmem:[%s2 + $0x118] sm:$0xff] %vm83, %v2510
  %2583 = vst.msk [vmem:[%s2 + $0x120] sm:$0xff] %vm83, %v2511
  %2584 = vst.msk [vmem:[%s2 + $0x128] sm:$0xff] %vm83, %v2512
  %2585 = vst.msk [vmem:[%s2 + $0x130] sm:$0xff] %vm83, %v2513
  %2586 = vst.msk [vmem:[%s2 + $0x138] sm:$0xff] %vm83, %v2514
  %2587 = vst.msk [vmem:[%s2 + $0x140] sm:$0xff] %vm83, %v2515
  %2588 = vst.msk [vmem:[%s2 + $0x148] sm:$0xff] %vm83, %v2516
  %2589 = vst.msk [vmem:[%s2 + $0x150] sm:$0xff] %vm83, %v2517
  %2590 = vst.msk [vmem:[%s2 + $0x158] sm:$0xff] %vm83, %v2518
  %2591 = vst.msk [vmem:[%s2 + $0x160] sm:$0xff] %vm83, %v2519
  %2592 = vst.msk [vmem:[%s2 + $0x168] sm:$0xff] %vm83, %v2520
  %2593 = vst.msk [vmem:[%s2 + $0x170] sm:$0xff] %vm83, %v2521
  %2594 = vst.msk [vmem:[%s2 + $0x178] sm:$0xff] %vm83, %v2522
  %2595 = vst.msk [vmem:[%s2 + $0x180] sm:$0xff] %vm83, %v2523
  %2596 = vst.msk [vmem:[%s2 + $0x188] sm:$0xff] %vm83, %v2524
  %2597 = vst.msk [vmem:[%s2 + $0x190] sm:$0xff] %vm83, %v2525
  %2598 = vst.msk [vmem:[%s2 + $0x198] sm:$0xff] %vm83, %v2526
  %2599 = vst.msk [vmem:[%s2 + $0x1a0] sm:$0xff] %vm83, %v2527
  %2600 = vst.msk [vmem:[%s2 + $0x1a8] sm:$0xff] %vm83, %v2528
  %2601 = vst.msk [vmem:[%s2 + $0x1b0] sm:$0xff] %vm83, %v2529
  %2602 = vst.msk [vmem:[%s2 + $0x1b8] sm:$0xff] %vm83, %v2530
  %2603 = vst.msk [vmem:[%s2 + $0x1c0] sm:$0xff] %vm83, %v2531
  %2604 = vst.msk [vmem:[%s2 + $0x1c8] sm:$0xff] %vm83, %v2532
  %2605 = vst.msk [vmem:[%s2 + $0x1d0] sm:$0xff] %vm83, %v2533
  %2606 = vst.msk [vmem:[%s2 + $0x1d8] sm:$0xff] %vm83, %v2534
  %2607 = vst.msk [vmem:[%s2 + $0x1e0] sm:$0xff] %vm83, %v2535
  %2608 = vst.msk [vmem:[%s2 + $0x1e8] sm:$0xff] %vm83, %v2536
  %2609 = vst.msk [vmem:[%s2 + $0x1f0] sm:$0xff] %vm83, %v2537
  %2610 = vst.msk [vmem:[%s2 + $0x1f8] sm:$0xff] %vm83, %v2538
  %2611 = vst.msk [vmem:[%s2 + $0x200] sm:$0xff] %vm83, %v2539
  %2612 = vst.msk [vmem:[%s2 + $0x208] sm:$0xff] %vm83, %v2540
  %2613 = vst.msk [vmem:[%s2 + $0x210] sm:$0xff] %vm83, %v2541
  %2614 = vst.msk [vmem:[%s2 + $0x218] sm:$0xff] %vm83, %v2542
  %2615 = vst.msk [vmem:[%s2 + $0x220] sm:$0xff] %vm83, %v2543
  %2616 = vst.msk [vmem:[%s2 + $0x228] sm:$0xff] %vm83, %v2544
  %2617 = vst.msk [vmem:[%s2 + $0x230] sm:$0xff] %vm83, %v2545
  %2618 = vst.msk [vmem:[%s2 + $0x238] sm:$0xff] %vm83, %v2546
  // Predicated region
  $region10: #{tpu_custom_call.1} parent=0 // pred_check
    _
  $region11: #{tpu_custom_call.1} parent=0 // pred_check_branch
    %2620 = sbr.rel (0) target = $region13
  $region12: #{tpu_custom_call.1} parent=0 // pred_region
    _
  $region13: #{tpu_custom_call.1} parent=0 // pred_fallthru
    _
  // Predicated region
  $region14: #{tpu_custom_call.1} parent=0 // pred_check
    _
  $region15: #{tpu_custom_call.1} parent=0 // pred_check_branch
    %2622 = sbr.rel (0) target = $region17
  $region16: #{tpu_custom_call.1} parent=0 // pred_region
    _
  $region17: #{tpu_custom_call.1} parent=0 // pred_fallthru
    _

</llo_original>
